<compile_context>
chip_gen: v5e
topology: v5e:2x2
jax: 0.10.0
libtpu: 0.0.40
codegen_flags: <defaults>
</compile_context>

<pallas_src>
import functools

import jax
import jax.numpy as jnp
from jax import lax
from jax.experimental import pallas as pl
from jax.experimental.pallas import tpu as pltpu

_SQRT_2 = 1.4142135623730951
_GELU_C = 0.7978845608028654  # sqrt(2/pi)


def _gelu_erf(x):
    # torch.nn.GELU() default; used by the depth controller and the reference.
    return 0.5 * x * (1.0 + lax.erf(x / _SQRT_2))


def _gelu_tanh(x):
    # tanh approximation (kernel only): transcendental runs on the EUP slot.
    return 0.5 * x * (1.0 + jnp.tanh(_GELU_C * (x + 0.044715 * (x * x * x))))


def _round_up(x, m):
    return (x + m - 1) // m * m


# ----------------------------------------------------------------------------
# Kernel: row-tiled adaptive recursion with per-tile depth bound.
#   grid = (num_row_tiles,), each step handles TM flattened (depth-sorted)
#   rows.  tile_depth (SMEM scalar prefetch) bounds the dynamic fori_loop so
#   only the iterations actually needed by this tile are executed; per-row
#   depths gate the result with jnp.where for tiles that straddle examples.
#
#   recursive_step : Linear(H,2H) -> GELU -> (Dropout=id) -> Linear(2H,H)
#   state_combiner : Linear(2H,H) -> GELU -> Linear(H,H)
#   cat([r, n]) @ Wc1 is computed as r @ Wc1[:H] + n @ Wc1[H:]  (no concat;
#   the split K=128 dots are optimal on v5e's 128-deep MXU).
# ----------------------------------------------------------------------------
def _recursive_rows_kernel(tile_depth_ref,                  # SMEM (n_tiles,) i32
                           depth_ref,                       # VMEM (TM, 1) i32
                           x_ref,                           # VMEM (TM, H) f32
                           wr1_ref, br1_ref, wr2_ref, br2_ref,
                           wc1a_ref, wc1b_ref, bc1_ref, wc2_ref, bc2_ref,
                           o_ref):                          # VMEM (TM, H) f32
    td = tile_depth_ref[pl.program_id(0)]                   # per-tile max depth
    h = x_ref[...]

    # Default: pass-through. Depth-0 tiles (and padded tiles) do no matmuls.
    o_ref[...] = h

    @pl.when(td > 0)
    def _():
        d = depth_ref[...]                                   # (TM, 1) per-row

        # Hoist the tiny (1, .) bias loads; weights are read at each dot site
        # so the compiler streams them from VMEM (no vreg-hoist / spill).
        br1 = br1_ref[...]
        br2 = br2_ref[...]
        bc1 = bc1_ref[...]
        bc2 = bc2_ref[...]

        def rec_step(xb):                                    # xb: (TM, H) bf16
            z = jnp.dot(xb, wr1_ref[...],
                        preferred_element_type=jnp.float32) + br1
            zb = _gelu_tanh(z).astype(jnp.bfloat16)
            return jnp.dot(zb, wr2_ref[...],
                           preferred_element_type=jnp.float32) + br2

        def combine(rb, n):                                  # rb bf16, n f32
            z = (jnp.dot(rb, wc1a_ref[...],
                         preferred_element_type=jnp.float32)
                 + jnp.dot(n.astype(jnp.bfloat16), wc1b_ref[...],
                           preferred_element_type=jnp.float32)
                 + bc1)
            zb = _gelu_tanh(z).astype(jnp.bfloat16)
            return jnp.dot(zb, wc2_ref[...],
                           preferred_element_type=jnp.float32) + bc2

        # First recursive step (every row with depth >= 1).
        r0 = rec_step(h.astype(jnp.bfloat16))

        def body(i, r_cur):
            rb = r_cur.astype(jnp.bfloat16)
            cand = combine(rb, rec_step(rb))
            # Rows shallower than the tile bound are frozen here.
            return jnp.where(d > i + 1, cand, r_cur)

        # Dynamic trip count: exactly (tile_depth - 1) combine iterations.
        r = lax.fori_loop(0, td - 1, body, r0)

        o_ref[...] = jnp.where(d > 0, h + r, h)


def _vmem_limit_bytes(TM, H):
    weights = 2 * (7 * H * H * 2 + 6 * H * 4)     # constant blocks (x2 buffers)
    io = 2 * (2 * TM * H * 4 + TM * 4)            # double-buffered row tiles
    scratch = 8 * TM * 2 * H * 4                  # f32 intermediates / spills
    est = weights + io + scratch
    # TODO(synk): for H >= ~1.5K on v7x (64 MiB VMEM) tile the weight blocks
    # over an extra grid axis instead of keeping them fully resident.
    return int(min(64 * 1024 * 1024, max(32 * 1024 * 1024, est)))


def _build_pallas_call(M_pad, TM, H):
    row = lambda shape: pl.BlockSpec(shape, lambda i, td: (i, 0))
    const = lambda shape: pl.BlockSpec(shape, lambda i, td: (0, 0))

    grid_spec = pltpu.PrefetchScalarGridSpec(
        num_scalar_prefetch=1,                    # per-tile depth bound (SMEM)
        grid=(M_pad // TM,),
        in_specs=[
            row((TM, 1)),          # per-row depth
            row((TM, H)),          # hidden rows
            const((H, 2 * H)),     # rs_w1 (bf16)
            const((1, 2 * H)),     # rs_b1
            const((2 * H, H)),     # rs_w2 (bf16)
            const((1, H)),         # rs_b2
            const((H, H)),         # sc_w1[:H] (bf16)
            const((H, H)),         # sc_w1[H:] (bf16)
            const((1, H)),         # sc_b1
            const((H, H)),         # sc_w2 (bf16)
            const((1, H)),         # sc_b2
        ],
        out_specs=row((TM, H)),
    )
    return pl.pallas_call(
        _recursive_rows_kernel,
        grid_spec=grid_spec,
        out_shape=jax.ShapeDtypeStruct((M_pad, H), jnp.float32),
        compiler_params=pltpu.CompilerParams(
            dimension_semantics=("parallel",),     # independent row tiles
            vmem_limit_bytes=_vmem_limit_bytes(TM, H)),
    )


def _pick_tm(M, target=512):
    # Near-even split with tiles <= `target` rows (amortizes ~0.35us/step while
    # staying VMEM-friendly on v7x), rounded to a multiple of 8, and at least
    # 2 grid steps when possible so both v7x TensorCores get work.
    n_tiles = max(2, -(-M // target))
    return max(8, _round_up(-(-M // n_tiles), 8))


# ----------------------------------------------------------------------------
# Wrapper (fully jitted; no host sync inside).
# ----------------------------------------------------------------------------
@functools.partial(jax.jit, static_argnames=("max_depth",))
def adaptive_recursive_reasoner(params, hidden_states, max_depth):
    del max_depth  # recursion bound comes from the controller output size
    B, S, H = hidden_states.shape
    hp = lax.Precision.HIGHEST

    # Depth controller: tiny [B,H] matmuls -> plain XLA in f32 HIGHEST with
    # exact erf GELU so the argmax decision matches the reference exactly.
    cls = hidden_states[:, 0].astype(jnp.float32)
    z = _gelu_erf(jnp.dot(cls, params["dc_w1"], precision=hp) + params["dc_b1"])
    logits = jnp.dot(z, params["dc_w2"], precision=hp) + params["dc_b2"]
    depth = jnp.argmax(logits, axis=-1).astype(jnp.int32)            # [B]

    # Flatten to rows; broadcast per-example depth to its rows; sort rows by
    # depth so tiles are depth-homogeneous (tight per-tile bounds).
    M = B * S
    x = hidden_states.reshape(M, H).astype(jnp.float32)
    d_rows = jnp.repeat(depth, S)                                    # [M]
    order = jnp.argsort(d_rows)
    inv_order = jnp.argsort(order)
    x_sorted = jnp.take(x, order, axis=0)
    d_sorted = jnp.take(d_rows, order)

    TM = _pick_tm(M)
    M_pad = _round_up(M, TM)
    if M_pad != M:
        x_sorted = jnp.pad(x_sorted, ((0, M_pad - M), (0, 0)))
        d_sorted = jnp.pad(d_sorted, (0, M_pad - M))                 # depth 0

    n_tiles = M_pad // TM
    tile_depth = jnp.max(d_sorted.reshape(n_tiles, TM), axis=1).astype(jnp.int32)
    d_sorted = d_sorted.reshape(M_pad, 1)

    # bf16 weights for the MXU (f32 accumulation in-kernel); biases stay f32.
    bf = lambda a: a.astype(jnp.bfloat16)
    out = _build_pallas_call(M_pad, TM, H)(
        tile_depth, d_sorted, x_sorted,
        bf(params["rs_w1"]), params["rs_b1"],
        bf(params["rs_w2"]), params["rs_b2"],
        bf(params["sc_w1"][:H]), bf(params["sc_w1"][H:]), params["sc_b1"],
        bf(params["sc_w2"]), params["sc_b2"])

    out = jnp.take(out[:M], inv_order, axis=0)
    return out.reshape(B, S, H)


# ----------------------------------------------------------------------------
# Deterministic parameter init (synthetic; shapes follow the module __init__)
# ----------------------------------------------------------------------------
def init_params(key, hidden_size, max_depth):
    H = hidden_size
    nd = max_depth + 1
    ks = jax.random.split(key, 12)
    n = lambda k, shape, s=0.05: (s * jax.random.normal(k, shape, jnp.float32))
    return {
        # depth_controller: Linear(H,H), Linear(H, max_depth+1)
        "dc_w1": n(ks[0], (H, H)),
        "dc_b1": n(ks[1], (1, H), 0.01),
        "dc_w2": n(ks[2], (H, nd)),
        # small ramp so the test exercises non-trivial (and varied) depths
        "dc_b2": n(ks[3], (1, nd), 0.01) + jnp.linspace(0.0, 0.3, nd)[None, :],
        # recursive_step: Linear(H, 2H), Linear(2H, H)
        "rs_w1": n(ks[4], (H, 2 * H)),
        "rs_b1": n(ks[5], (1, 2 * H), 0.01),
        "rs_w2": n(ks[6], (2 * H, H)),
        "rs_b2": n(ks[7], (1, H), 0.01),
        # state_combiner: Linear(2H, H), Linear(H, H)
        "sc_w1": n(ks[8], (2 * H, H)),
        "sc_b1": n(ks[9], (1, H), 0.01),
        "sc_w2": n(ks[10], (H, H)),
        "sc_b2": n(ks[11], (1, H), 0.01),
    }


# ----------------------------------------------------------------------------
# Pure-JAX reference (eval-mode), mirrors the PyTorch forward in f32 HIGHEST
# with exact erf GELU.
# ----------------------------------------------------------------------------
def reference_forward(params, hidden_states, max_depth):
    dot = functools.partial(jnp.dot, precision=lax.Precision.HIGHEST)
    H = hidden_states.shape[-1]
    cls = hidden_states[:, 0]
    z = _gelu_erf(dot(cls, params["dc_w1"]) + params["dc_b1"])
    logits = dot(z, params["dc_w2"]) + params["dc_b2"]
    depth = jnp.argmax(logits, axis=-1)

    wc1a, wc1b = params["sc_w1"][:H], params["sc_w1"][H:]

    def rec_step(x):
        z = _gelu_erf(dot(x, params["rs_w1"]) + params["rs_b1"])
        return dot(z, params["rs_w2"]) + params["rs_b2"]

    def comb(r, n_):
        z = _gelu_erf(dot(r, wc1a) + dot(n_, wc1b) + params["sc_b1"])
        return dot(z, params["sc_w2"]) + params["sc_b2"]

    outs = []
    for i in range(hidden_states.shape[0]):
        d = int(depth[i])
        h = hidden_states[i]
        if d == 0:
            outs.append(h)
        else:
            r = rec_step(h)
            for _ in range(1, d):
                n_ = rec_step(r)
                r = comb(r, n_)
            outs.append(h + r)
    return jnp.stack(outs, axis=0)


if __name__ == "__main__":
    B, S, H = 2, 8, 128          # H multiple of 128 -> lane-dense blocks
    MAX_DEPTH = 5

    key = jax.random.PRNGKey(0)
    k_params, k_x = jax.random.split(key)
    params = init_params(k_params, H, MAX_DEPTH)
    hidden_states = jax.random.normal(k_x, (B, S, H), jnp.float32)

    out = adaptive_recursive_reasoner(params, hidden_states, max_depth=MAX_DEPTH)
    out = jax.block_until_ready(out)

    ref = reference_forward(params, hidden_states, MAX_DEPTH)
    assert out.shape == (B, S, H)
    assert bool(jnp.all(jnp.isfinite(out)))
    # Tolerance deliberately loosened: kernel matmuls are bf16-in / f32-accum
    # and the kernel GELU is tanh-approximate, while the reference is f32
    # Precision.HIGHEST with exact erf GELU.
    err = float(jnp.max(jnp.abs(out - ref)))
    assert bool(jnp.allclose(out, ref, rtol=2.5e-2, atol=2.5e-2)), (
        f"max abs err = {err}"
    )

    print("KERNEL_OK")
</pallas_src>

<mosaic_0001>
module attributes {stable_mosaic.version = 11 : i64} {
  func.func @_recursive_rows_kernel(%arg0: i32, %arg1: memref<2xi32, #tpu.memory_space<smem>>, %arg2: memref<8x1xi32, #tpu.memory_space<vmem>>, %arg3: memref<8x128xf32, #tpu.memory_space<vmem>>, %arg4: memref<128x256xbf16, #tpu.memory_space<vmem>>, %arg5: memref<1x256xf32, #tpu.memory_space<vmem>>, %arg6: memref<256x128xbf16, #tpu.memory_space<vmem>>, %arg7: memref<1x128xf32, #tpu.memory_space<vmem>>, %arg8: memref<128x128xbf16, #tpu.memory_space<vmem>>, %arg9: memref<128x128xbf16, #tpu.memory_space<vmem>>, %arg10: memref<1x128xf32, #tpu.memory_space<vmem>>, %arg11: memref<128x128xbf16, #tpu.memory_space<vmem>>, %arg12: memref<1x128xf32, #tpu.memory_space<vmem>>, %arg13: memref<8x128xf32, #tpu.memory_space<vmem>>) attributes {dimension_semantics = [#tpu.dimension_semantics<parallel>], iteration_bounds = array<i64: 2>, scalar_prefetch = 1 : i64, scratch_operands = 0 : i64, tpu.core_type = #tpu.core_type<tc>, window_params = [{transform_indices = @transform_0, window_bounds = array<i64: 8, 1>}, {transform_indices = @transform_1, window_bounds = array<i64: 8, 128>}, {pipeline_mode = #tpu.pipeline_mode<synchronous>, transform_indices = @transform_2, window_bounds = array<i64: 128, 256>}, {pipeline_mode = #tpu.pipeline_mode<synchronous>, transform_indices = @transform_3, window_bounds = array<i64: 1, 256>}, {pipeline_mode = #tpu.pipeline_mode<synchronous>, transform_indices = @transform_4, window_bounds = array<i64: 256, 128>}, {pipeline_mode = #tpu.pipeline_mode<synchronous>, transform_indices = @transform_5, window_bounds = array<i64: 1, 128>}, {pipeline_mode = #tpu.pipeline_mode<synchronous>, transform_indices = @transform_6, window_bounds = array<i64: 128, 128>}, {pipeline_mode = #tpu.pipeline_mode<synchronous>, transform_indices = @transform_7, window_bounds = array<i64: 128, 128>}, {pipeline_mode = #tpu.pipeline_mode<synchronous>, transform_indices = @transform_8, window_bounds = array<i64: 1, 128>}, {pipeline_mode = #tpu.pipeline_mode<synchronous>, transform_indices = @transform_9, window_bounds = array<i64: 128, 128>}, {pipeline_mode = #tpu.pipeline_mode<synchronous>, transform_indices = @transform_10, window_bounds = array<i64: 1, 128>}, {transform_indices = @transform_11, window_bounds = array<i64: 8, 128>}]} {
    %0 = arith.index_cast %arg0 : i32 to index
    %1 = memref.load %arg1[%0] : memref<2xi32, #tpu.memory_space<smem>>
    %c0 = arith.constant 0 : index
    %c0_0 = arith.constant 0 : index
    %2 = vector.load %arg3[%c0, %c0_0] : memref<8x128xf32, #tpu.memory_space<vmem>>, vector<8x128xf32>
    %c0_1 = arith.constant 0 : index
    %c0_2 = arith.constant 0 : index
    %3 = vector.load %arg13[%c0_1, %c0_2] : memref<8x128xf32, #tpu.memory_space<vmem>>, vector<8x128xf32>
    tpu.vector_store %arg13[%c0_1, %c0_2], %2 {strides = array<i32>} : memref<8x128xf32, #tpu.memory_space<vmem>>, vector<8x128xf32>,
    %c0_i32 = arith.constant 0 : i32
    %4 = arith.cmpi sgt, %1, %c0_i32 : i32
    %5 = arith.extui %4 : i1 to i32
    %c0_i32_3 = arith.constant 0 : i32
    %6 = arith.cmpi ne, %5, %c0_i32_3 : i32
    scf.if %6 {
      %c0_4 = arith.constant 0 : index
      %c0_5 = arith.constant 0 : index
      %7 = vector.load %arg2[%c0_4, %c0_5] : memref<8x1xi32, #tpu.memory_space<vmem>>, vector<8x1xi32>
      %c0_6 = arith.constant 0 : index
      %c0_7 = arith.constant 0 : index
      %8 = vector.load %arg5[%c0_6, %c0_7] : memref<1x256xf32, #tpu.memory_space<vmem>>, vector<1x256xf32>
      %c0_8 = arith.constant 0 : index
      %c0_9 = arith.constant 0 : index
      %9 = vector.load %arg7[%c0_8, %c0_9] : memref<1x128xf32, #tpu.memory_space<vmem>>, vector<1x128xf32>
      %c0_10 = arith.constant 0 : index
      %c0_11 = arith.constant 0 : index
      %10 = vector.load %arg10[%c0_10, %c0_11] : memref<1x128xf32, #tpu.memory_space<vmem>>, vector<1x128xf32>
      %c0_12 = arith.constant 0 : index
      %c0_13 = arith.constant 0 : index
      %11 = vector.load %arg12[%c0_12, %c0_13] : memref<1x128xf32, #tpu.memory_space<vmem>>, vector<1x128xf32>
      %12 = arith.truncf %2 : vector<8x128xf32> to vector<8x128xbf16>
      %c0_14 = arith.constant 0 : index
      %c0_15 = arith.constant 0 : index
      %13 = vector.load %arg4[%c0_14, %c0_15] : memref<128x256xbf16, #tpu.memory_space<vmem>>, vector<128x256xbf16>
      %cst = arith.constant dense<0.000000e+00> : vector<8x256xf32>
      %14 = tpu.matmul %12, %13, %cst {dimension_numbers = #tpu.dot_dimension_numbers<[1], [0], [0], [1], [0, 0, 1, 1], [], []>} : vector<8x128xbf16>, vector<128x256xbf16>, vector<8x256xf32> -> vector<8x256xf32>
      %15 = vector.broadcast %8 : vector<1x256xf32> to vector<8x256xf32>
      %16 = arith.addf %14, %15 : vector<8x256xf32>
      %cst_16 = arith.constant 5.000000e-01 : f32
      %17 = vector.broadcast %cst_16 : f32 to vector<8x256xf32>
      %18 = arith.mulf %17, %16 : vector<8x256xf32>
      %19 = arith.mulf %16, %16 : vector<8x256xf32>
      %20 = arith.mulf %19, %16 : vector<8x256xf32>
      %cst_17 = arith.constant 4.471500e-02 : f32
      %21 = vector.broadcast %cst_17 : f32 to vector<8x256xf32>
      %22 = arith.mulf %21, %20 : vector<8x256xf32>
      %23 = arith.addf %16, %22 : vector<8x256xf32>
      %cst_18 = arith.constant 0.797884583 : f32
      %24 = vector.broadcast %cst_18 : f32 to vector<8x256xf32>
      %25 = arith.mulf %24, %23 : vector<8x256xf32>
      %26 = math.tanh %25 : vector<8x256xf32>
      %cst_19 = arith.constant 1.000000e+00 : f32
      %27 = vector.broadcast %cst_19 : f32 to vector<8x256xf32>
      %28 = arith.addf %27, %26 : vector<8x256xf32>
      %29 = arith.mulf %18, %28 : vector<8x256xf32>
      %30 = arith.truncf %29 : vector<8x256xf32> to vector<8x256xbf16>
      %c0_20 = arith.constant 0 : index
      %c0_21 = arith.constant 0 : index
      %31 = vector.load %arg6[%c0_20, %c0_21] : memref<256x128xbf16, #tpu.memory_space<vmem>>, vector<256x128xbf16>
      %cst_22 = arith.constant dense<0.000000e+00> : vector<8x128xf32>
      %32 = tpu.matmul %30, %31, %cst_22 {dimension_numbers = #tpu.dot_dimension_numbers<[1], [0], [0], [1], [0, 0, 1, 1], [], []>} : vector<8x256xbf16>, vector<256x128xbf16>, vector<8x128xf32> -> vector<8x128xf32>
      %33 = vector.broadcast %9 : vector<1x128xf32> to vector<8x128xf32>
      %34 = arith.addf %32, %33 : vector<8x128xf32>
      %c1_i32 = arith.constant 1 : i32
      %35 = arith.subi %1, %c1_i32 : i32
      %c0_i32_23 = arith.constant 0 : i32
      %36 = arith.subi %35, %c0_i32_23 : i32
      %37 = arith.addi %c0_i32_23, %36 : i32
      %c1_i32_24 = arith.constant 1 : i32
      %38 = scf.for %arg14 = %c0_i32_23 to %37 step %c1_i32_24 iter_args(%arg15 = %34) -> (vector<8x128xf32>)  : i32 {
        %46 = arith.truncf %arg15 : vector<8x128xf32> to vector<8x128xbf16>
        %c0_28 = arith.constant 0 : index
        %c0_29 = arith.constant 0 : index
        %47 = vector.load %arg4[%c0_28, %c0_29] : memref<128x256xbf16, #tpu.memory_space<vmem>>, vector<128x256xbf16>
        %cst_30 = arith.constant dense<0.000000e+00> : vector<8x256xf32>
        %48 = tpu.matmul %46, %47, %cst_30 {dimension_numbers = #tpu.dot_dimension_numbers<[1], [0], [0], [1], [0, 0, 1, 1], [], []>} : vector<8x128xbf16>, vector<128x256xbf16>, vector<8x256xf32> -> vector<8x256xf32>
        %49 = vector.broadcast %8 : vector<1x256xf32> to vector<8x256xf32>
        %50 = arith.addf %48, %49 : vector<8x256xf32>
        %cst_31 = arith.constant 5.000000e-01 : f32
        %51 = vector.broadcast %cst_31 : f32 to vector<8x256xf32>
        %52 = arith.mulf %51, %50 : vector<8x256xf32>
        %53 = arith.mulf %50, %50 : vector<8x256xf32>
        %54 = arith.mulf %53, %50 : vector<8x256xf32>
        %cst_32 = arith.constant 4.471500e-02 : f32
        %55 = vector.broadcast %cst_32 : f32 to vector<8x256xf32>
        %56 = arith.mulf %55, %54 : vector<8x256xf32>
        %57 = arith.addf %50, %56 : vector<8x256xf32>
        %cst_33 = arith.constant 0.797884583 : f32
        %58 = vector.broadcast %cst_33 : f32 to vector<8x256xf32>
        %59 = arith.mulf %58, %57 : vector<8x256xf32>
        %60 = math.tanh %59 : vector<8x256xf32>
        %cst_34 = arith.constant 1.000000e+00 : f32
        %61 = vector.broadcast %cst_34 : f32 to vector<8x256xf32>
        %62 = arith.addf %61, %60 : vector<8x256xf32>
        %63 = arith.mulf %52, %62 : vector<8x256xf32>
        %64 = arith.truncf %63 : vector<8x256xf32> to vector<8x256xbf16>
        %c0_35 = arith.constant 0 : index
        %c0_36 = arith.constant 0 : index
        %65 = vector.load %arg6[%c0_35, %c0_36] : memref<256x128xbf16, #tpu.memory_space<vmem>>, vector<256x128xbf16>
        %cst_37 = arith.constant dense<0.000000e+00> : vector<8x128xf32>
        %66 = tpu.matmul %64, %65, %cst_37 {dimension_numbers = #tpu.dot_dimension_numbers<[1], [0], [0], [1], [0, 0, 1, 1], [], []>} : vector<8x256xbf16>, vector<256x128xbf16>, vector<8x128xf32> -> vector<8x128xf32>
        %67 = vector.broadcast %9 : vector<1x128xf32> to vector<8x128xf32>
        %68 = arith.addf %66, %67 : vector<8x128xf32>
        %c0_38 = arith.constant 0 : index
        %c0_39 = arith.constant 0 : index
        %69 = vector.load %arg8[%c0_38, %c0_39] : memref<128x128xbf16, #tpu.memory_space<vmem>>, vector<128x128xbf16>
        %cst_40 = arith.constant dense<0.000000e+00> : vector<8x128xf32>
        %70 = tpu.matmul %46, %69, %cst_40 {dimension_numbers = #tpu.dot_dimension_numbers<[1], [0], [0], [1], [0, 0, 1, 1], [], []>} : vector<8x128xbf16>, vector<128x128xbf16>, vector<8x128xf32> -> vector<8x128xf32>
        %71 = arith.truncf %68 : vector<8x128xf32> to vector<8x128xbf16>
        %c0_41 = arith.constant 0 : index
        %c0_42 = arith.constant 0 : index
        %72 = vector.load %arg9[%c0_41, %c0_42] : memref<128x128xbf16, #tpu.memory_space<vmem>>, vector<128x128xbf16>
        %cst_43 = arith.constant dense<0.000000e+00> : vector<8x128xf32>
        %73 = tpu.matmul %71, %72, %cst_43 {dimension_numbers = #tpu.dot_dimension_numbers<[1], [0], [0], [1], [0, 0, 1, 1], [], []>} : vector<8x128xbf16>, vector<128x128xbf16>, vector<8x128xf32> -> vector<8x128xf32>
        %74 = arith.addf %70, %73 : vector<8x128xf32>
        %75 = vector.broadcast %10 : vector<1x128xf32> to vector<8x128xf32>
        %76 = arith.addf %74, %75 : vector<8x128xf32>
        %cst_44 = arith.constant 5.000000e-01 : f32
        %77 = vector.broadcast %cst_44 : f32 to vector<8x128xf32>
        %78 = arith.mulf %77, %76 : vector<8x128xf32>
        %79 = arith.mulf %76, %76 : vector<8x128xf32>
        %80 = arith.mulf %79, %76 : vector<8x128xf32>
        %cst_45 = arith.constant 4.471500e-02 : f32
        %81 = vector.broadcast %cst_45 : f32 to vector<8x128xf32>
        %82 = arith.mulf %81, %80 : vector<8x128xf32>
        %83 = arith.addf %76, %82 : vector<8x128xf32>
        %cst_46 = arith.constant 0.797884583 : f32
        %84 = vector.broadcast %cst_46 : f32 to vector<8x128xf32>
        %85 = arith.mulf %84, %83 : vector<8x128xf32>
        %86 = math.tanh %85 : vector<8x128xf32>
        %cst_47 = arith.constant 1.000000e+00 : f32
        %87 = vector.broadcast %cst_47 : f32 to vector<8x128xf32>
        %88 = arith.addf %87, %86 : vector<8x128xf32>
        %89 = arith.mulf %78, %88 : vector<8x128xf32>
        %90 = arith.truncf %89 : vector<8x128xf32> to vector<8x128xbf16>
        %c0_48 = arith.constant 0 : index
        %c0_49 = arith.constant 0 : index
        %91 = vector.load %arg11[%c0_48, %c0_49] : memref<128x128xbf16, #tpu.memory_space<vmem>>, vector<128x128xbf16>
        %cst_50 = arith.constant dense<0.000000e+00> : vector<8x128xf32>
        %92 = tpu.matmul %90, %91, %cst_50 {dimension_numbers = #tpu.dot_dimension_numbers<[1], [0], [0], [1], [0, 0, 1, 1], [], []>} : vector<8x128xbf16>, vector<128x128xbf16>, vector<8x128xf32> -> vector<8x128xf32>
        %93 = vector.broadcast %11 : vector<1x128xf32> to vector<8x128xf32>
        %94 = arith.addf %92, %93 : vector<8x128xf32>
        %c1_i32_51 = arith.constant 1 : i32
        %95 = arith.addi %arg14, %c1_i32_51 : i32
        %96 = vector.broadcast %95 : i32 to vector<8x1xi32>
        %97 = arith.cmpi sgt, %7, %96 : vector<8x1xi32>
        %98 = vector.shape_cast %97 : vector<8x1xi1> to vector<8x1xi1>
        %99 = vector.broadcast %98 : vector<8x1xi1> to vector<8x128xi1>
        %100 = arith.select %99, %94, %arg15 : vector<8x128xi1>, vector<8x128xf32>
        scf.yield %100 : vector<8x128xf32>
      }
      %c0_i32_25 = arith.constant 0 : i32
      %39 = vector.broadcast %c0_i32_25 : i32 to vector<8x1xi32>
      %40 = arith.cmpi sgt, %7, %39 : vector<8x1xi32>
      %41 = arith.addf %2, %38 : vector<8x128xf32>
      %42 = vector.shape_cast %40 : vector<8x1xi1> to vector<8x1xi1>
      %43 = vector.broadcast %42 : vector<8x1xi1> to vector<8x128xi1>
      %44 = arith.select %43, %41, %2 : vector<8x128xi1>, vector<8x128xf32>
      %c0_26 = arith.constant 0 : index
      %c0_27 = arith.constant 0 : index
      %45 = vector.load %arg13[%c0_26, %c0_27] : memref<8x128xf32, #tpu.memory_space<vmem>>, vector<8x128xf32>
      tpu.vector_store %arg13[%c0_26, %c0_27], %44 {strides = array<i32>} : memref<8x128xf32, #tpu.memory_space<vmem>>, vector<8x128xf32>,
    } else {
    }
    return
  }
  func.func @transform_0(%arg0: i32, %arg1: memref<2xi32, #tpu.memory_space<smem>>) -> (i32, i32) {
    %c0_i32 = arith.constant 0 : i32
    %c0_i32_0 = arith.constant 0 : i32
    return %arg0, %c0_i32 : i32, i32
  }
  func.func @transform_1(%arg0: i32, %arg1: memref<2xi32, #tpu.memory_space<smem>>) -> (i32, i32) {
    %c0_i32 = arith.constant 0 : i32
    %c0_i32_0 = arith.constant 0 : i32
    return %arg0, %c0_i32 : i32, i32
  }
  func.func @transform_2(%arg0: i32, %arg1: memref<2xi32, #tpu.memory_space<smem>>) -> (i32, i32) {
    %c0_i32 = arith.constant 0 : i32
    %c0_i32_0 = arith.constant 0 : i32
    %c0_i32_1 = arith.constant 0 : i32
    return %c0_i32, %c0_i32_0 : i32, i32
  }
  func.func @transform_3(%arg0: i32, %arg1: memref<2xi32, #tpu.memory_space<smem>>) -> (i32, i32) {
    %c0_i32 = arith.constant 0 : i32
    %c0_i32_0 = arith.constant 0 : i32
    %c0_i32_1 = arith.constant 0 : i32
    return %c0_i32, %c0_i32_0 : i32, i32
  }
  func.func @transform_4(%arg0: i32, %arg1: memref<2xi32, #tpu.memory_space<smem>>) -> (i32, i32) {
    %c0_i32 = arith.constant 0 : i32
    %c0_i32_0 = arith.constant 0 : i32
    %c0_i32_1 = arith.constant 0 : i32
    return %c0_i32, %c0_i32_0 : i32, i32
  }
  func.func @transform_5(%arg0: i32, %arg1: memref<2xi32, #tpu.memory_space<smem>>) -> (i32, i32) {
    %c0_i32 = arith.constant 0 : i32
    %c0_i32_0 = arith.constant 0 : i32
    %c0_i32_1 = arith.constant 0 : i32
    return %c0_i32, %c0_i32_0 : i32, i32
  }
  func.func @transform_6(%arg0: i32, %arg1: memref<2xi32, #tpu.memory_space<smem>>) -> (i32, i32) {
    %c0_i32 = arith.constant 0 : i32
    %c0_i32_0 = arith.constant 0 : i32
    %c0_i32_1 = arith.constant 0 : i32
    return %c0_i32, %c0_i32_0 : i32, i32
  }
  func.func @transform_7(%arg0: i32, %arg1: memref<2xi32, #tpu.memory_space<smem>>) -> (i32, i32) {
    %c0_i32 = arith.constant 0 : i32
    %c0_i32_0 = arith.constant 0 : i32
    %c0_i32_1 = arith.constant 0 : i32
    return %c0_i32, %c0_i32_0 : i32, i32
  }
  func.func @transform_8(%arg0: i32, %arg1: memref<2xi32, #tpu.memory_space<smem>>) -> (i32, i32) {
    %c0_i32 = arith.constant 0 : i32
    %c0_i32_0 = arith.constant 0 : i32
    %c0_i32_1 = arith.constant 0 : i32
    return %c0_i32, %c0_i32_0 : i32, i32
  }
  func.func @transform_9(%arg0: i32, %arg1: memref<2xi32, #tpu.memory_space<smem>>) -> (i32, i32) {
    %c0_i32 = arith.constant 0 : i32
    %c0_i32_0 = arith.constant 0 : i32
    %c0_i32_1 = arith.constant 0 : i32
    return %c0_i32, %c0_i32_0 : i32, i32
  }
  func.func @transform_10(%arg0: i32, %arg1: memref<2xi32, #tpu.memory_space<smem>>) -> (i32, i32) {
    %c0_i32 = arith.constant 0 : i32
    %c0_i32_0 = arith.constant 0 : i32
    %c0_i32_1 = arith.constant 0 : i32
    return %c0_i32, %c0_i32_0 : i32, i32
  }
  func.func @transform_11(%arg0: i32, %arg1: memref<2xi32, #tpu.memory_space<smem>>) -> (i32, i32) {
    %c0_i32 = arith.constant 0 : i32
    %c0_i32_0 = arith.constant 0 : i32
    return %arg0, %c0_i32 : i32, i32
  }
}

</mosaic_0001>

<llo_original>
// kernel: adaptive_recursive_reasoner.1
$region0: #{adaptive_recursive_reasoner.1}
  #allocation0 [shape = 'u32[]', space=smem, size = 0x4, offset = 0x4, fixed_abs, tag = 'smem constant byte address 0x4 - core index']
  #allocation1 [shape = 'u32[72,128]{1,0:T(1,128)}', space=vmem, size = 0x9000, scoped, tag = 'internal scratch']
  #allocation2 [shape = 's32[1]{0}', space=sflag, size = 0x4, scoped, tag = 'scoped memory for adaptive_recursive_reasoner.1']
  #allocation3 [shape = 'u8[512]{0}', space=smem, size = 0x200, scoped, tag = 'prefetched SMEM operand 0']
  %s0 = inlined_call_operand.vmem [shape: s32[2], index: 0, kind: input, shape index: {}]
  %s1 = inlined_call_operand.vmem [shape: s32[16,1], index: 1, kind: input, shape index: {}]
  %s2 = inlined_call_operand.vmem [shape: f32[16,128], index: 2, kind: input, shape index: {}]
  %s3 = inlined_call_operand.vmem [shape: bf16[128,256], index: 3, kind: input, shape index: {}]
  %s4 = inlined_call_operand.vmem [shape: f32[1,256], index: 4, kind: input, shape index: {}]
  %s5 = inlined_call_operand.vmem [shape: bf16[256,128], index: 5, kind: input, shape index: {}]
  %s6 = inlined_call_operand.vmem [shape: f32[1,128], index: 6, kind: input, shape index: {}]
  %s7 = inlined_call_operand.vmem [shape: bf16[128,128], index: 7, kind: input, shape index: {}]
  %s8 = inlined_call_operand.vmem [shape: bf16[128,128], index: 8, kind: input, shape index: {}]
  %s9 = inlined_call_operand.vmem [shape: f32[1,128], index: 9, kind: input, shape index: {}]
  %s10 = inlined_call_operand.vmem [shape: bf16[128,128], index: 10, kind: input, shape index: {}]
  %s11 = inlined_call_operand.vmem [shape: f32[1,128], index: 11, kind: input, shape index: {}]
  %s12 = inlined_call_operand.vmem [shape: f32[16,128], index: 12, kind: output, shape index: {}]
  %s13 = sld [smem:[#allocation0]]
  $region88: #{adaptive_recursive_reasoner.1} parent=0
    _
  %s15 = ssub.s32 1, %s13
  %s16 = scalar_select 0, %s15, %s13
  %s18 = sshll.u32 %s0, 4
  %s19 = int_to_ptr.vmem [resolvable:$true] %s18
  %21 = dma.vmem_to_smem %s19, 16, [#allocation3], [#allocation2]
  %23 = dma.done [#allocation2], 16
  %24 = sfence
  loop: start=0, step=1, limit=4
  $region2: #{adaptive_recursive_reasoner.1} parent=0 // loop_pre_header
    _
  $region3: #{adaptive_recursive_reasoner.1} parent=0 // loop_header
    %s26 = sphi 0, %s30
    %p27 = scmp.ge.s32.totalorder %s26, 4
    %s36 = sphi 0, %s38
    %s39 = sphi 0, %s36
    %s40 = sphi 0, %s39
    %s56 = sphi 0, %s40
    %s62 = sphi 0, %s64
    %s65 = sphi 0, %s62
    %s66 = sphi 0, %s65
    %s82 = sphi 0, %s66
    %s86 = sphi 0, %s86
    %s88 = sphi 0, %s86
    %s89 = sphi 0, %s88
    %s103 = sphi 0, %s89
    %s107 = sphi 0, %s107
    %s109 = sphi 0, %s107
    %s110 = sphi 0, %s109
    %s124 = sphi 0, %s110
    %s128 = sphi 0, %s128
    %s130 = sphi 0, %s128
    %s131 = sphi 0, %s130
    %s145 = sphi 0, %s131
    %s149 = sphi 0, %s149
    %s151 = sphi 0, %s149
    %s152 = sphi 0, %s151
    %s166 = sphi 0, %s152
    %s170 = sphi 0, %s170
    %s172 = sphi 0, %s170
    %s173 = sphi 0, %s172
    %s187 = sphi 0, %s173
    %s191 = sphi 0, %s191
    %s193 = sphi 0, %s191
    %s194 = sphi 0, %s193
    %s208 = sphi 0, %s194
    %s212 = sphi 0, %s212
    %s214 = sphi 0, %s212
    %s215 = sphi 0, %s214
    %s229 = sphi 0, %s215
    %s233 = sphi 0, %s233
    %s235 = sphi 0, %s233
    %s236 = sphi 0, %s235
    %s250 = sphi 0, %s236
    %s254 = sphi 0, %s254
    %s256 = sphi 0, %s254
    %s257 = sphi 0, %s256
    %s271 = sphi 0, %s257
    %s277 = sphi 0, %s279
    %s280 = sphi 0, %s277
    %s281 = sphi 0, %s280
    %s297 = sphi 0, %s281
  $region4: #{adaptive_recursive_reasoner.1} parent=0 // loop_header_branch
    %29 = sbr.rel (%p27) target = $region8
  $region5: #{adaptive_recursive_reasoner.1} parent=0 // loop_body
    %s31 = ssub.s32 %s26, 1
    %s32 = ssub.s32 %s26, 2
    %s33 = sadd.s32 %s26, 1
    %s34 = ssub.s32 %s26, %s33
    %p35 = scmp.eq.s32.totalorder %s34, 0
    %s37 = sadd.s32 %s36, 1
    %s38 = scalar_select %p35, %s36, %s37
    %p41 = pneg %p35
    %p42 = scmp.eq.s32.totalorder %s26, 1
    %p43 = por %p41, %p42
    %p44 = scmp.ne.s32.totalorder %s36, %s39
    %p45 = scmp.eq.s32.totalorder %s26, 0
    %p46 = por %p44, %p45
    %p47 = scmp.ne.s32.totalorder %s36, %s39
    %p48 = scmp.eq.s32.totalorder %s31, 1
    %p49 = por %p47, %p48
    %p50 = scmp.ne.s32.totalorder %s39, %s40
    %p51 = scmp.eq.s32.totalorder %s31, 0
    %p52 = por %p50, %p51
    %p53 = scmp.ne.s32.totalorder %s39, %s40
    %p54 = scmp.eq.s32.totalorder %s32, 1
    %p55 = por %p53, %p54
    %p57 = scmp.ne.s32.totalorder %s40, %s56
    %p58 = scmp.eq.s32.totalorder %s32, 0
    %p59 = por %p57, %p58
    %s60 = ssub.s32 %s26, %s33
    %p61 = scmp.eq.s32.totalorder %s60, 0
    %s63 = sadd.s32 %s62, 1
    %s64 = scalar_select %p61, %s62, %s63
    %p67 = pneg %p61
    %p68 = scmp.eq.s32.totalorder %s26, 1
    %p69 = por %p67, %p68
    %p70 = scmp.ne.s32.totalorder %s62, %s65
    %p71 = scmp.eq.s32.totalorder %s26, 0
    %p72 = por %p70, %p71
    %p73 = scmp.ne.s32.totalorder %s62, %s65
    %p74 = scmp.eq.s32.totalorder %s31, 1
    %p75 = por %p73, %p74
    %p76 = scmp.ne.s32.totalorder %s65, %s66
    %p77 = scmp.eq.s32.totalorder %s31, 0
    %p78 = por %p76, %p77
    %p79 = scmp.ne.s32.totalorder %s65, %s66
    %p80 = scmp.eq.s32.totalorder %s32, 1
    %p81 = por %p79, %p80
    %p83 = scmp.ne.s32.totalorder %s66, %s82
    %p84 = scmp.eq.s32.totalorder %s32, 0
    %p85 = por %p83, %p84
    %s87 = sadd.s32 %s86, 1
    %p90 = scmp.eq.s32.totalorder %s26, 1
    %p91 = scmp.ne.s32.totalorder %s86, %s88
    %p92 = scmp.eq.s32.totalorder %s26, 0
    %p93 = por %p91, %p92
    %p94 = scmp.ne.s32.totalorder %s86, %s88
    %p95 = scmp.eq.s32.totalorder %s31, 1
    %p96 = por %p94, %p95
    %p97 = scmp.ne.s32.totalorder %s88, %s89
    %p98 = scmp.eq.s32.totalorder %s31, 0
    %p99 = por %p97, %p98
    %p100 = scmp.ne.s32.totalorder %s88, %s89
    %p101 = scmp.eq.s32.totalorder %s32, 1
    %p102 = por %p100, %p101
    %p104 = scmp.ne.s32.totalorder %s89, %s103
    %p105 = scmp.eq.s32.totalorder %s32, 0
    %p106 = por %p104, %p105
    %s108 = sadd.s32 %s107, 1
    %p111 = scmp.eq.s32.totalorder %s26, 1
    %p112 = scmp.ne.s32.totalorder %s107, %s109
    %p113 = scmp.eq.s32.totalorder %s26, 0
    %p114 = por %p112, %p113
    %p115 = scmp.ne.s32.totalorder %s107, %s109
    %p116 = scmp.eq.s32.totalorder %s31, 1
    %p117 = por %p115, %p116
    %p118 = scmp.ne.s32.totalorder %s109, %s110
    %p119 = scmp.eq.s32.totalorder %s31, 0
    %p120 = por %p118, %p119
    %p121 = scmp.ne.s32.totalorder %s109, %s110
    %p122 = scmp.eq.s32.totalorder %s32, 1
    %p123 = por %p121, %p122
    %p125 = scmp.ne.s32.totalorder %s110, %s124
    %p126 = scmp.eq.s32.totalorder %s32, 0
    %p127 = por %p125, %p126
    %s129 = sadd.s32 %s128, 1
    %p132 = scmp.eq.s32.totalorder %s26, 1
    %p133 = scmp.ne.s32.totalorder %s128, %s130
    %p134 = scmp.eq.s32.totalorder %s26, 0
    %p135 = por %p133, %p134
    %p136 = scmp.ne.s32.totalorder %s128, %s130
    %p137 = scmp.eq.s32.totalorder %s31, 1
    %p138 = por %p136, %p137
    %p139 = scmp.ne.s32.totalorder %s130, %s131
    %p140 = scmp.eq.s32.totalorder %s31, 0
    %p141 = por %p139, %p140
    %p142 = scmp.ne.s32.totalorder %s130, %s131
    %p143 = scmp.eq.s32.totalorder %s32, 1
    %p144 = por %p142, %p143
    %p146 = scmp.ne.s32.totalorder %s131, %s145
    %p147 = scmp.eq.s32.totalorder %s32, 0
    %p148 = por %p146, %p147
    %s150 = sadd.s32 %s149, 1
    %p153 = scmp.eq.s32.totalorder %s26, 1
    %p154 = scmp.ne.s32.totalorder %s149, %s151
    %p155 = scmp.eq.s32.totalorder %s26, 0
    %p156 = por %p154, %p155
    %p157 = scmp.ne.s32.totalorder %s149, %s151
    %p158 = scmp.eq.s32.totalorder %s31, 1
    %p159 = por %p157, %p158
    %p160 = scmp.ne.s32.totalorder %s151, %s152
    %p161 = scmp.eq.s32.totalorder %s31, 0
    %p162 = por %p160, %p161
    %p163 = scmp.ne.s32.totalorder %s151, %s152
    %p164 = scmp.eq.s32.totalorder %s32, 1
    %p165 = por %p163, %p164
    %p167 = scmp.ne.s32.totalorder %s152, %s166
    %p168 = scmp.eq.s32.totalorder %s32, 0
    %p169 = por %p167, %p168
    %s171 = sadd.s32 %s170, 1
    %p174 = scmp.eq.s32.totalorder %s26, 1
    %p175 = scmp.ne.s32.totalorder %s170, %s172
    %p176 = scmp.eq.s32.totalorder %s26, 0
    %p177 = por %p175, %p176
    %p178 = scmp.ne.s32.totalorder %s170, %s172
    %p179 = scmp.eq.s32.totalorder %s31, 1
    %p180 = por %p178, %p179
    %p181 = scmp.ne.s32.totalorder %s172, %s173
    %p182 = scmp.eq.s32.totalorder %s31, 0
    %p183 = por %p181, %p182
    %p184 = scmp.ne.s32.totalorder %s172, %s173
    %p185 = scmp.eq.s32.totalorder %s32, 1
    %p186 = por %p184, %p185
    %p188 = scmp.ne.s32.totalorder %s173, %s187
    %p189 = scmp.eq.s32.totalorder %s32, 0
    %p190 = por %p188, %p189
    %s192 = sadd.s32 %s191, 1
    %p195 = scmp.eq.s32.totalorder %s26, 1
    %p196 = scmp.ne.s32.totalorder %s191, %s193
    %p197 = scmp.eq.s32.totalorder %s26, 0
    %p198 = por %p196, %p197
    %p199 = scmp.ne.s32.totalorder %s191, %s193
    %p200 = scmp.eq.s32.totalorder %s31, 1
    %p201 = por %p199, %p200
    %p202 = scmp.ne.s32.totalorder %s193, %s194
    %p203 = scmp.eq.s32.totalorder %s31, 0
    %p204 = por %p202, %p203
    %p205 = scmp.ne.s32.totalorder %s193, %s194
    %p206 = scmp.eq.s32.totalorder %s32, 1
    %p207 = por %p205, %p206
    %p209 = scmp.ne.s32.totalorder %s194, %s208
    %p210 = scmp.eq.s32.totalorder %s32, 0
    %p211 = por %p209, %p210
    %s213 = sadd.s32 %s212, 1
    %p216 = scmp.eq.s32.totalorder %s26, 1
    %p217 = scmp.ne.s32.totalorder %s212, %s214
    %p218 = scmp.eq.s32.totalorder %s26, 0
    %p219 = por %p217, %p218
    %p220 = scmp.ne.s32.totalorder %s212, %s214
    %p221 = scmp.eq.s32.totalorder %s31, 1
    %p222 = por %p220, %p221
    %p223 = scmp.ne.s32.totalorder %s214, %s215
    %p224 = scmp.eq.s32.totalorder %s31, 0
    %p225 = por %p223, %p224
    %p226 = scmp.ne.s32.totalorder %s214, %s215
    %p227 = scmp.eq.s32.totalorder %s32, 1
    %p228 = por %p226, %p227
    %p230 = scmp.ne.s32.totalorder %s215, %s229
    %p231 = scmp.eq.s32.totalorder %s32, 0
    %p232 = por %p230, %p231
    %s234 = sadd.s32 %s233, 1
    %p237 = scmp.eq.s32.totalorder %s26, 1
    %p238 = scmp.ne.s32.totalorder %s233, %s235
    %p239 = scmp.eq.s32.totalorder %s26, 0
    %p240 = por %p238, %p239
    %p241 = scmp.ne.s32.totalorder %s233, %s235
    %p242 = scmp.eq.s32.totalorder %s31, 1
    %p243 = por %p241, %p242
    %p244 = scmp.ne.s32.totalorder %s235, %s236
    %p245 = scmp.eq.s32.totalorder %s31, 0
    %p246 = por %p244, %p245
    %p247 = scmp.ne.s32.totalorder %s235, %s236
    %p248 = scmp.eq.s32.totalorder %s32, 1
    %p249 = por %p247, %p248
    %p251 = scmp.ne.s32.totalorder %s236, %s250
    %p252 = scmp.eq.s32.totalorder %s32, 0
    %p253 = por %p251, %p252
    %s255 = sadd.s32 %s254, 1
    %p258 = scmp.eq.s32.totalorder %s26, 1
    %p259 = scmp.ne.s32.totalorder %s254, %s256
    %p260 = scmp.eq.s32.totalorder %s26, 0
    %p261 = por %p259, %p260
    %p262 = scmp.ne.s32.totalorder %s254, %s256
    %p263 = scmp.eq.s32.totalorder %s31, 1
    %p264 = por %p262, %p263
    %p265 = scmp.ne.s32.totalorder %s256, %s257
    %p266 = scmp.eq.s32.totalorder %s31, 0
    %p267 = por %p265, %p266
    %p268 = scmp.ne.s32.totalorder %s256, %s257
    %p269 = scmp.eq.s32.totalorder %s32, 1
    %p270 = por %p268, %p269
    %p272 = scmp.ne.s32.totalorder %s257, %s271
    %p273 = scmp.eq.s32.totalorder %s32, 0
    %p274 = por %p272, %p273
    %s275 = ssub.s32 %s26, %s33
    %p276 = scmp.eq.s32.totalorder %s275, 0
    %s278 = sadd.s32 %s277, 1
    %s279 = scalar_select %p276, %s277, %s278
    %p282 = pneg %p276
    %p283 = scmp.eq.s32.totalorder %s26, 1
    %p284 = por %p282, %p283
    %p285 = scmp.ne.s32.totalorder %s277, %s280
    %p286 = scmp.eq.s32.totalorder %s26, 0
    %p287 = por %p285, %p286
    %p288 = scmp.ne.s32.totalorder %s277, %s280
    %p289 = scmp.eq.s32.totalorder %s31, 1
    %p290 = por %p288, %p289
    %p291 = scmp.ne.s32.totalorder %s280, %s281
    %p292 = scmp.eq.s32.totalorder %s31, 0
    %p293 = por %p291, %p292
    %p294 = scmp.ne.s32.totalorder %s280, %s281
    %p295 = scmp.eq.s32.totalorder %s32, 1
    %p296 = por %p294, %p295
    %p298 = scmp.ne.s32.totalorder %s281, %s297
    %p299 = scmp.eq.s32.totalorder %s32, 0
    %p300 = por %p298, %p299
    %p301 = scmp.le.s32.totalorder 1, %s26
    %p302 = scmp.lt.s32.totalorder %s26, 3
    %p303 = pnand %p301, %p302
    %p304 = pneg %p303
    // Predicated region
    $region9: #{adaptive_recursive_reasoner.1} parent=5 // pred_check
      _
    $region10: #{adaptive_recursive_reasoner.1} parent=5 // pred_check_branch
      %306 = sbr.rel (%p303) target = $region12
    $region11: #{adaptive_recursive_reasoner.1} parent=5 // pred_region
      %s307 = ssub.s32 %s26, 1
      // Predicated region
      $region13: #{adaptive_recursive_reasoner.1} parent=11 // pred_check
        %p308 = pneg %p99
      $region14: #{adaptive_recursive_reasoner.1} parent=11 // pred_check_branch
        %310 = sbr.rel (%p308) target = $region16
      $region15: #{adaptive_recursive_reasoner.1} parent=11 // pred_region
        _
      $region16: #{adaptive_recursive_reasoner.1} parent=11 // pred_fallthru
        _
      // Predicated region
      $region17: #{adaptive_recursive_reasoner.1} parent=11 // pred_check
        %p311 = pneg %p120
      $region18: #{adaptive_recursive_reasoner.1} parent=11 // pred_check_branch
        %313 = sbr.rel (%p311) target = $region20
      $region19: #{adaptive_recursive_reasoner.1} parent=11 // pred_region
        _
      $region20: #{adaptive_recursive_reasoner.1} parent=11 // pred_fallthru
        _
      // Predicated region
      $region21: #{adaptive_recursive_reasoner.1} parent=11 // pred_check
        %p314 = pneg %p141
      $region22: #{adaptive_recursive_reasoner.1} parent=11 // pred_check_branch
        %316 = sbr.rel (%p314) target = $region24
      $region23: #{adaptive_recursive_reasoner.1} parent=11 // pred_region
        _
      $region24: #{adaptive_recursive_reasoner.1} parent=11 // pred_fallthru
        _
      // Predicated region
      $region25: #{adaptive_recursive_reasoner.1} parent=11 // pred_check
        %p317 = pneg %p162
      $region26: #{adaptive_recursive_reasoner.1} parent=11 // pred_check_branch
        %319 = sbr.rel (%p317) target = $region28
      $region27: #{adaptive_recursive_reasoner.1} parent=11 // pred_region
        _
      $region28: #{adaptive_recursive_reasoner.1} parent=11 // pred_fallthru
        _
      // Predicated region
      $region29: #{adaptive_recursive_reasoner.1} parent=11 // pred_check
        %p320 = pneg %p183
      $region30: #{adaptive_recursive_reasoner.1} parent=11 // pred_check_branch
        %322 = sbr.rel (%p320) target = $region32
      $region31: #{adaptive_recursive_reasoner.1} parent=11 // pred_region
        _
      $region32: #{adaptive_recursive_reasoner.1} parent=11 // pred_fallthru
        _
      // Predicated region
      $region33: #{adaptive_recursive_reasoner.1} parent=11 // pred_check
        %p323 = pneg %p204
      $region34: #{adaptive_recursive_reasoner.1} parent=11 // pred_check_branch
        %325 = sbr.rel (%p323) target = $region36
      $region35: #{adaptive_recursive_reasoner.1} parent=11 // pred_region
        _
      $region36: #{adaptive_recursive_reasoner.1} parent=11 // pred_fallthru
        _
      // Predicated region
      $region37: #{adaptive_recursive_reasoner.1} parent=11 // pred_check
        %p326 = pneg %p225
      $region38: #{adaptive_recursive_reasoner.1} parent=11 // pred_check_branch
        %328 = sbr.rel (%p326) target = $region40
      $region39: #{adaptive_recursive_reasoner.1} parent=11 // pred_region
        _
      $region40: #{adaptive_recursive_reasoner.1} parent=11 // pred_fallthru
        _
      // Predicated region
      $region41: #{adaptive_recursive_reasoner.1} parent=11 // pred_check
        %p329 = pneg %p246
      $region42: #{adaptive_recursive_reasoner.1} parent=11 // pred_check_branch
        %331 = sbr.rel (%p329) target = $region44
      $region43: #{adaptive_recursive_reasoner.1} parent=11 // pred_region
        _
      $region44: #{adaptive_recursive_reasoner.1} parent=11 // pred_fallthru
        _
      // Predicated region
      $region45: #{adaptive_recursive_reasoner.1} parent=11 // pred_check
        %p332 = pneg %p267
      $region46: #{adaptive_recursive_reasoner.1} parent=11 // pred_check_branch
        %334 = sbr.rel (%p332) target = $region48
      $region47: #{adaptive_recursive_reasoner.1} parent=11 // pred_region
        _
      $region48: #{adaptive_recursive_reasoner.1} parent=11 // pred_fallthru
        _
    $region12: #{adaptive_recursive_reasoner.1} parent=5 // pred_fallthru
      _
    %p335 = scmp.lt.s32.totalorder %s26, 2
    // Predicated region
    $region49: #{adaptive_recursive_reasoner.1} parent=5 // pred_check
      %p336 = pneg %p335
    $region50: #{adaptive_recursive_reasoner.1} parent=5 // pred_check_branch
      %338 = sbr.rel (%p336) target = $region52
    $region51: #{adaptive_recursive_reasoner.1} parent=5 // pred_region
      // Predicated region
      $region53: #{adaptive_recursive_reasoner.1} parent=51 // pred_check
        %p339 = pneg %p46
      $region54: #{adaptive_recursive_reasoner.1} parent=51 // pred_check_branch
        %341 = sbr.rel (%p339) target = $region56
      $region55: #{adaptive_recursive_reasoner.1} parent=51 // pred_region
        %p342 = scmp.lt.s32.totalorder %s26, 1
        %s343 = scalar_select %p342, %s26, 1
        %s344 = smul.addr %s343, 8
        %s345 = scalar_lea.vmem %s1, %s344
      $region56: #{adaptive_recursive_reasoner.1} parent=51 // pred_fallthru
        _
      // Predicated region
      $region57: #{adaptive_recursive_reasoner.1} parent=51 // pred_check
        %p346 = pneg %p72
      $region58: #{adaptive_recursive_reasoner.1} parent=51 // pred_check_branch
        %348 = sbr.rel (%p346) target = $region60
      $region59: #{adaptive_recursive_reasoner.1} parent=51 // pred_region
        %p349 = scmp.lt.s32.totalorder %s26, 1
        %s350 = scalar_select %p349, %s26, 1
        %s351 = smul.addr %s350, 8
        %s352 = scalar_lea.vmem %s2, %s351
      $region60: #{adaptive_recursive_reasoner.1} parent=51 // pred_fallthru
        _
    $region52: #{adaptive_recursive_reasoner.1} parent=5 // pred_fallthru
      _
    %p353 = scmp.le.s32.totalorder 1, %s26
    %p354 = scmp.lt.s32.totalorder %s26, 3
    %p355 = pnand %p353, %p354
    %p356 = pneg %p355
    // Predicated region
    $region61: #{adaptive_recursive_reasoner.1} parent=5 // pred_check
      _
    $region62: #{adaptive_recursive_reasoner.1} parent=5 // pred_check_branch
      %358 = sbr.rel (%p355) target = $region64
    $region63: #{adaptive_recursive_reasoner.1} parent=5 // pred_region
      %s359 = ssub.s32 %s26, 1
      %p360 = scmp.lt.s32.totalorder %s31, 1
      %s361 = scalar_select %p360, %s31, 1
      %s362 = smul.addr %s361, 8
      %s363 = scalar_lea.vmem %s1, %s362
      %p364 = pneg %p52
      %p365 = pneg %p49
      %p366 = scmp.lt.s32.totalorder %s31, 1
      %s367 = scalar_select %p366, %s31, 1
      %s368 = smul.addr %s367, 8
      %s369 = scalar_lea.vmem %s2, %s368
      %p370 = pneg %p78
      %p371 = pneg %p75
      %p372 = pneg %p99
      %p373 = pneg %p96
      %p374 = pneg %p120
      %p375 = pneg %p117
      %p376 = pneg %p141
      %p377 = pneg %p138
      %p378 = pneg %p162
      %p379 = pneg %p159
      %p380 = pneg %p183
      %p381 = pneg %p180
      %p382 = pneg %p204
      %p383 = pneg %p201
      %p384 = pneg %p225
      %p385 = pneg %p222
      %p386 = pneg %p246
      %p387 = pneg %p243
      %p388 = pneg %p267
      %p389 = pneg %p264
      %p390 = pneg %p293
      %p391 = pneg %p290
      %p392 = scmp.lt.s32.totalorder %s31, 1
      %s393 = scalar_select %p392, %s31, 1
      %s394 = smul.addr %s393, 8
      %s395 = scalar_lea.vmem %s12, %s394
      %p396 = scmp.lt.s32.totalorder %s31, 1
      %s397 = scalar_select %p396, %s31, 1
      %s398 = smul.addr %s397, 8
      %s399 = scalar_lea.vmem %s1, %s398
      %p400 = scmp.lt.s32.totalorder %s31, 1
      %s401 = scalar_select %p400, %s31, 1
      %s402 = smul.addr %s401, 8
      %s403 = scalar_lea.vmem %s2, %s402
      %p404 = scmp.lt.s32.totalorder %s31, 1
      %s405 = scalar_select %p404, %s31, 1
      %s406 = smul.addr %s405, 8
      %s407 = scalar_lea.vmem %s12, %s406
      %s408 = sld [smem:[#allocation3 + %s31]]
      %v409 = vld [vmem:[%s403] sm:$0xff]
      %410 = vst [vmem:[%s407] sm:$0xff] %v409
      %p411 = scmp.gt.s32.totalorder %s408, 0
      // Predicated region
      $region65: #{adaptive_recursive_reasoner.1} parent=63 // pred_check
        %p412 = pneg %p411
      $region66: #{adaptive_recursive_reasoner.1} parent=63 // pred_check_branch
        %414 = sbr.rel (%p412) target = $region68
      $region67: #{adaptive_recursive_reasoner.1} parent=63 // pred_region
        %v415 = vld [vmem:[%s399] sm:$0xff]
        %v416 = vld [vmem:[%s4] sm:$0x3]
        %v417 = vld [vmem:[%s6] sm:$0x1]
        %v418 = vld [vmem:[%s9] sm:$0x1]
        %v419 = vld [vmem:[%s11] sm:$0x1]
        %v420 = vpack.c.bf16 %v409, %v409
        %v421 = vld [vmem:[%s3] sm:$0xff]
        %v422 = vld [vmem:[%s3 + $0x8] sm:$0xff]
        %v423 = vld [vmem:[%s3 + $0x10] sm:$0xff]
        %v424 = vld [vmem:[%s3 + $0x18] sm:$0xff]
        %v425 = vld [vmem:[%s3 + $0x20] sm:$0xff]
        %v426 = vld [vmem:[%s3 + $0x28] sm:$0xff]
        %v427 = vld [vmem:[%s3 + $0x30] sm:$0xff]
        %v428 = vld [vmem:[%s3 + $0x38] sm:$0xff]
        %v429 = vld [vmem:[%s3 + $0x40] sm:$0xff]
        %v430 = vld [vmem:[%s3 + $0x48] sm:$0xff]
        %v431 = vld [vmem:[%s3 + $0x50] sm:$0xff]
        %v432 = vld [vmem:[%s3 + $0x58] sm:$0xff]
        %v433 = vld [vmem:[%s3 + $0x60] sm:$0xff]
        %v434 = vld [vmem:[%s3 + $0x68] sm:$0xff]
        %v435 = vld [vmem:[%s3 + $0x70] sm:$0xff]
        %v436 = vld [vmem:[%s3 + $0x78] sm:$0xff]
        %v438 = vperm.slane %v416, 0
        %v439 = vperm.slane %v416, 1
        %v458 = vunpack.c.l.b16 %v421
        %v459 = vunpack.c.h.b16 %v421
        %v460 = vunpack.c.l.b16 %v422
        %v461 = vunpack.c.h.b16 %v422
        %v462 = vunpack.c.l.b16 %v423
        %v463 = vunpack.c.h.b16 %v423
        %v464 = vunpack.c.l.b16 %v424
        %v465 = vunpack.c.h.b16 %v424
        %v466 = vunpack.c.l.b16 %v425
        %v467 = vunpack.c.h.b16 %v425
        %v468 = vunpack.c.l.b16 %v426
        %v469 = vunpack.c.h.b16 %v426
        %v470 = vunpack.c.l.b16 %v427
        %v471 = vunpack.c.h.b16 %v427
        %v472 = vunpack.c.l.b16 %v428
        %v473 = vunpack.c.h.b16 %v428
        %v474 = vunpack.c.l.b16 %v429
        %v475 = vunpack.c.h.b16 %v429
        %v476 = vunpack.c.l.b16 %v430
        %v477 = vunpack.c.h.b16 %v430
        %v478 = vunpack.c.l.b16 %v431
        %v479 = vunpack.c.h.b16 %v431
        %v480 = vunpack.c.l.b16 %v432
        %v481 = vunpack.c.h.b16 %v432
        %v482 = vunpack.c.l.b16 %v433
        %v483 = vunpack.c.h.b16 %v433
        %v484 = vunpack.c.l.b16 %v434
        %v485 = vunpack.c.h.b16 %v434
        %v486 = vunpack.c.l.b16 %v435
        %v487 = vunpack.c.h.b16 %v435
        %v488 = vunpack.c.l.b16 %v436
        %v489 = vunpack.c.h.b16 %v436
        %v490 = vpack.c.b16 %v460, %v458
        %v491 = vpack.c.b16 %v461, %v459
        %v492 = vpack.c.b16 %v464, %v462
        %v493 = vpack.c.b16 %v465, %v463
        %v494 = vpack.c.b16 %v468, %v466
        %v495 = vpack.c.b16 %v469, %v467
        %v496 = vpack.c.b16 %v472, %v470
        %v497 = vpack.c.b16 %v473, %v471
        %v498 = vpack.c.b16 %v476, %v474
        %v499 = vpack.c.b16 %v477, %v475
        %v500 = vpack.c.b16 %v480, %v478
        %v501 = vpack.c.b16 %v481, %v479
        %v502 = vpack.c.b16 %v484, %v482
        %v503 = vpack.c.b16 %v485, %v483
        %v504 = vpack.c.b16 %v488, %v486
        %v505 = vpack.c.b16 %v489, %v487
        %522 = vmatpush.bf16.msra.mxu0 %v504
        %523 = vmatpush.bf16.msra.mxu0 %v502
        %524 = vmatpush.bf16.msra.mxu0 %v500
        %525 = vmatpush.bf16.msra.mxu0 %v498
        %526 = vmatpush.bf16.msra.mxu0 %v496
        %527 = vmatpush.bf16.msra.mxu0 %v494
        %528 = vmatpush.bf16.msra.mxu0 %v492
        %529 = vmatpush.bf16.msra.mxu0 %v490
        %530 = vmatmul.bf16.gmra.mxu0 %v420
        %v531 = vpop.f32.mrf.mxu0
        %v532 = vadd.f32 %v438, %v531
        %v533 = vpop.f32.mrf.mxu0
        %534 = vdwg.mxu0
        %535 = vmatpush.bf16.msra.mxu0 %v505
        %536 = vmatpush.bf16.msra.mxu0 %v503
        %537 = vmatpush.bf16.msra.mxu0 %v501
        %538 = vmatpush.bf16.msra.mxu0 %v499
        %539 = vmatpush.bf16.msra.mxu0 %v497
        %540 = vmatpush.bf16.msra.mxu0 %v495
        %541 = vmatpush.bf16.msra.mxu0 %v493
        %542 = vmatpush.bf16.msra.mxu0 %v491
        %543 = vmatmul.bf16.gmra.mxu0 %v420
        %v544 = vpop.f32.mrf.mxu0
        %v545 = vadd.f32 %v439, %v544
        %v546 = vpop.f32.mrf.mxu0
        %547 = vdwg.mxu0
        %v548 = vmul.f32 %v532, 0.5
        %v549 = vmul.f32 %v545, 0.5
        %v550 = vmul.f32 %v532, %v532
        %v551 = vmul.f32 %v545, %v545
        %v552 = vmul.f32 %v550, %v532
        %v553 = vmul.f32 %v551, %v545
        %v554 = vmul.f32 %v552, 0.044715
        %v555 = vmul.f32 %v553, 0.044715
        %v556 = vadd.f32 %v532, %v554
        %v557 = vadd.f32 %v545, %v555
        %v558 = vmul.f32 %v556, 0.7978846
        %v559 = vmul.f32 %v557, 0.7978846
        %v560 = vtanh.pop %v558
        %v561 = vtanh.pop %v559
        %v562 = vadd.f32 %v560, 1.0
        %v563 = vadd.f32 %v561, 1.0
        %v564 = vmul.f32 %v548, %v562
        %v565 = vmul.f32 %v549, %v563
        %v566 = vpack.c.bf16 %v564, %v564
        %v567 = vpack.c.bf16 %v565, %v565
        %v568 = vld [vmem:[%s5] sm:$0xf]
        %v569 = vld [vmem:[%s5 + $0x4] sm:$0xf]
        %v570 = vld [vmem:[%s5 + $0x8] sm:$0xf]
        %v571 = vld [vmem:[%s5 + $0xc] sm:$0xf]
        %v572 = vld [vmem:[%s5 + $0x10] sm:$0xf]
        %v573 = vld [vmem:[%s5 + $0x14] sm:$0xf]
        %v574 = vld [vmem:[%s5 + $0x18] sm:$0xf]
        %v575 = vld [vmem:[%s5 + $0x1c] sm:$0xf]
        %v576 = vld [vmem:[%s5 + $0x20] sm:$0xf]
        %v577 = vld [vmem:[%s5 + $0x24] sm:$0xf]
        %v578 = vld [vmem:[%s5 + $0x28] sm:$0xf]
        %v579 = vld [vmem:[%s5 + $0x2c] sm:$0xf]
        %v580 = vld [vmem:[%s5 + $0x30] sm:$0xf]
        %v581 = vld [vmem:[%s5 + $0x34] sm:$0xf]
        %v582 = vld [vmem:[%s5 + $0x38] sm:$0xf]
        %v583 = vld [vmem:[%s5 + $0x3c] sm:$0xf]
        %v584 = vld [vmem:[%s5 + $0x40] sm:$0xf]
        %v585 = vld [vmem:[%s5 + $0x44] sm:$0xf]
        %v586 = vld [vmem:[%s5 + $0x48] sm:$0xf]
        %v587 = vld [vmem:[%s5 + $0x4c] sm:$0xf]
        %v588 = vld [vmem:[%s5 + $0x50] sm:$0xf]
        %v589 = vld [vmem:[%s5 + $0x54] sm:$0xf]
        %v590 = vld [vmem:[%s5 + $0x58] sm:$0xf]
        %v591 = vld [vmem:[%s5 + $0x5c] sm:$0xf]
        %v592 = vld [vmem:[%s5 + $0x60] sm:$0xf]
        %v593 = vld [vmem:[%s5 + $0x64] sm:$0xf]
        %v594 = vld [vmem:[%s5 + $0x68] sm:$0xf]
        %v595 = vld [vmem:[%s5 + $0x6c] sm:$0xf]
        %v596 = vld [vmem:[%s5 + $0x70] sm:$0xf]
        %v597 = vld [vmem:[%s5 + $0x74] sm:$0xf]
        %v598 = vld [vmem:[%s5 + $0x78] sm:$0xf]
        %v599 = vld [vmem:[%s5 + $0x7c] sm:$0xf]
        %v601 = vperm.slane %v417, 0
        %v635 = vunpack.c.l.b16 %v568
        %v636 = vunpack.c.l.b16 %v569
        %v637 = vunpack.c.l.b16 %v570
        %v638 = vunpack.c.l.b16 %v571
        %v639 = vunpack.c.l.b16 %v572
        %v640 = vunpack.c.l.b16 %v573
        %v641 = vunpack.c.l.b16 %v574
        %v642 = vunpack.c.l.b16 %v575
        %v643 = vunpack.c.l.b16 %v576
        %v644 = vunpack.c.l.b16 %v577
        %v645 = vunpack.c.l.b16 %v578
        %v646 = vunpack.c.l.b16 %v579
        %v647 = vunpack.c.l.b16 %v580
        %v648 = vunpack.c.l.b16 %v581
        %v649 = vunpack.c.l.b16 %v582
        %v650 = vunpack.c.l.b16 %v583
        %v651 = vunpack.c.l.b16 %v584
        %v652 = vunpack.c.l.b16 %v585
        %v653 = vunpack.c.l.b16 %v586
        %v654 = vunpack.c.l.b16 %v587
        %v655 = vunpack.c.l.b16 %v588
        %v656 = vunpack.c.l.b16 %v589
        %v657 = vunpack.c.l.b16 %v590
        %v658 = vunpack.c.l.b16 %v591
        %v659 = vunpack.c.l.b16 %v592
        %v660 = vunpack.c.l.b16 %v593
        %v661 = vunpack.c.l.b16 %v594
        %v662 = vunpack.c.l.b16 %v595
        %v663 = vunpack.c.l.b16 %v596
        %v664 = vunpack.c.l.b16 %v597
        %v665 = vunpack.c.l.b16 %v598
        %v666 = vunpack.c.l.b16 %v599
        %v667 = vpack.c.b16 %v636, %v635
        %v668 = vpack.c.b16 %v638, %v637
        %v669 = vpack.c.b16 %v640, %v639
        %v670 = vpack.c.b16 %v642, %v641
        %v671 = vpack.c.b16 %v644, %v643
        %v672 = vpack.c.b16 %v646, %v645
        %v673 = vpack.c.b16 %v648, %v647
        %v674 = vpack.c.b16 %v650, %v649
        %v675 = vpack.c.b16 %v652, %v651
        %v676 = vpack.c.b16 %v654, %v653
        %v677 = vpack.c.b16 %v656, %v655
        %v678 = vpack.c.b16 %v658, %v657
        %v679 = vpack.c.b16 %v660, %v659
        %v680 = vpack.c.b16 %v662, %v661
        %v681 = vpack.c.b16 %v664, %v663
        %v682 = vpack.c.b16 %v666, %v665
        %699 = vmatpush.bf16.msra.mxu0 %v674
        %700 = vmatpush.bf16.msra.mxu0 %v673
        %701 = vmatpush.bf16.msra.mxu0 %v672
        %702 = vmatpush.bf16.msra.mxu0 %v671
        %703 = vmatpush.bf16.msra.mxu0 %v670
        %704 = vmatpush.bf16.msra.mxu0 %v669
        %705 = vmatpush.bf16.msra.mxu0 %v668
        %706 = vmatpush.bf16.msra.mxu0 %v667
        %707 = vmatmul.bf16.gmra.mxu0 %v566
        %v708 = vpop.f32.mrf.mxu0
        %v709 = vadd.f32 %v601, %v708
        %v710 = vpop.f32.mrf.mxu0
        %711 = vdwg.mxu0
        %712 = vmatpush.bf16.msra.mxu0 %v682
        %713 = vmatpush.bf16.msra.mxu0 %v681
        %714 = vmatpush.bf16.msra.mxu0 %v680
        %715 = vmatpush.bf16.msra.mxu0 %v679
        %716 = vmatpush.bf16.msra.mxu0 %v678
        %717 = vmatpush.bf16.msra.mxu0 %v677
        %718 = vmatpush.bf16.msra.mxu0 %v676
        %719 = vmatpush.bf16.msra.mxu0 %v675
        %720 = vmatmul.bf16.gmra.mxu0 %v567
        %v721 = vpop.f32.mrf.mxu0
        %v722 = vadd.f32 %v709, %v721
        %v723 = vpop.f32.mrf.mxu0
        %724 = vdwg.mxu0
        %s725 = ssub.s32 %s408, 1
        // While loop
        $region69: #{adaptive_recursive_reasoner.1} parent=67 // loop_pre_header
          _
        $region70: #{adaptive_recursive_reasoner.1} parent=67 // loop_header
          %s727 = sphi 0, %s729
          %p728 = scmp.ge.s32.totalorder %s727, %s725
          %v732 = vphi %v722, %v1287
        $region71: #{adaptive_recursive_reasoner.1} parent=67 // loop_header_branch
          %731 = sbr.rel (%p728) target = $region75
        $region72: #{adaptive_recursive_reasoner.1} parent=67 // loop_body
          %v733 = vpack.c.bf16 %v732, %v732
          %v734 = vld [vmem:[%s3] sm:$0xff]
          %v735 = vld [vmem:[%s3 + $0x8] sm:$0xff]
          %v736 = vld [vmem:[%s3 + $0x10] sm:$0xff]
          %v737 = vld [vmem:[%s3 + $0x18] sm:$0xff]
          %v738 = vld [vmem:[%s3 + $0x20] sm:$0xff]
          %v739 = vld [vmem:[%s3 + $0x28] sm:$0xff]
          %v740 = vld [vmem:[%s3 + $0x30] sm:$0xff]
          %v741 = vld [vmem:[%s3 + $0x38] sm:$0xff]
          %v742 = vld [vmem:[%s3 + $0x40] sm:$0xff]
          %v743 = vld [vmem:[%s3 + $0x48] sm:$0xff]
          %v744 = vld [vmem:[%s3 + $0x50] sm:$0xff]
          %v745 = vld [vmem:[%s3 + $0x58] sm:$0xff]
          %v746 = vld [vmem:[%s3 + $0x60] sm:$0xff]
          %v747 = vld [vmem:[%s3 + $0x68] sm:$0xff]
          %v748 = vld [vmem:[%s3 + $0x70] sm:$0xff]
          %v749 = vld [vmem:[%s3 + $0x78] sm:$0xff]
          %v766 = vunpack.c.l.b16 %v734
          %v767 = vunpack.c.h.b16 %v734
          %v768 = vunpack.c.l.b16 %v735
          %v769 = vunpack.c.h.b16 %v735
          %v770 = vunpack.c.l.b16 %v736
          %v771 = vunpack.c.h.b16 %v736
          %v772 = vunpack.c.l.b16 %v737
          %v773 = vunpack.c.h.b16 %v737
          %v774 = vunpack.c.l.b16 %v738
          %v775 = vunpack.c.h.b16 %v738
          %v776 = vunpack.c.l.b16 %v739
          %v777 = vunpack.c.h.b16 %v739
          %v778 = vunpack.c.l.b16 %v740
          %v779 = vunpack.c.h.b16 %v740
          %v780 = vunpack.c.l.b16 %v741
          %v781 = vunpack.c.h.b16 %v741
          %v782 = vunpack.c.l.b16 %v742
          %v783 = vunpack.c.h.b16 %v742
          %v784 = vunpack.c.l.b16 %v743
          %v785 = vunpack.c.h.b16 %v743
          %v786 = vunpack.c.l.b16 %v744
          %v787 = vunpack.c.h.b16 %v744
          %v788 = vunpack.c.l.b16 %v745
          %v789 = vunpack.c.h.b16 %v745
          %v790 = vunpack.c.l.b16 %v746
          %v791 = vunpack.c.h.b16 %v746
          %v792 = vunpack.c.l.b16 %v747
          %v793 = vunpack.c.h.b16 %v747
          %v794 = vunpack.c.l.b16 %v748
          %v795 = vunpack.c.h.b16 %v748
          %v796 = vunpack.c.l.b16 %v749
          %v797 = vunpack.c.h.b16 %v749
          %v798 = vpack.c.b16 %v768, %v766
          %v799 = vpack.c.b16 %v769, %v767
          %v800 = vpack.c.b16 %v772, %v770
          %v801 = vpack.c.b16 %v773, %v771
          %v802 = vpack.c.b16 %v776, %v774
          %v803 = vpack.c.b16 %v777, %v775
          %v804 = vpack.c.b16 %v780, %v778
          %v805 = vpack.c.b16 %v781, %v779
          %v806 = vpack.c.b16 %v784, %v782
          %v807 = vpack.c.b16 %v785, %v783
          %v808 = vpack.c.b16 %v788, %v786
          %v809 = vpack.c.b16 %v789, %v787
          %v810 = vpack.c.b16 %v792, %v790
          %v811 = vpack.c.b16 %v793, %v791
          %v812 = vpack.c.b16 %v796, %v794
          %v813 = vpack.c.b16 %v797, %v795
          %830 = vmatpush.bf16.msra.mxu0 %v812
          %831 = vmatpush.bf16.msra.mxu0 %v810
          %832 = vmatpush.bf16.msra.mxu0 %v808
          %833 = vmatpush.bf16.msra.mxu0 %v806
          %834 = vmatpush.bf16.msra.mxu0 %v804
          %835 = vmatpush.bf16.msra.mxu0 %v802
          %836 = vmatpush.bf16.msra.mxu0 %v800
          %837 = vmatpush.bf16.msra.mxu0 %v798
          %838 = vmatmul.bf16.gmra.mxu0 %v733
          %v839 = vpop.f32.mrf.mxu0
          %v840 = vadd.f32 %v438, %v839
          %v841 = vpop.f32.mrf.mxu0
          %842 = vdwg.mxu0
          %843 = vmatpush.bf16.msra.mxu0 %v813
          %844 = vmatpush.bf16.msra.mxu0 %v811
          %845 = vmatpush.bf16.msra.mxu0 %v809
          %846 = vmatpush.bf16.msra.mxu0 %v807
          %847 = vmatpush.bf16.msra.mxu0 %v805
          %848 = vmatpush.bf16.msra.mxu0 %v803
          %849 = vmatpush.bf16.msra.mxu0 %v801
          %850 = vmatpush.bf16.msra.mxu0 %v799
          %851 = vmatmul.bf16.gmra.mxu0 %v733
          %v852 = vpop.f32.mrf.mxu0
          %v853 = vadd.f32 %v439, %v852
          %v854 = vpop.f32.mrf.mxu0
          %855 = vdwg.mxu0
          %v856 = vmul.f32 %v840, 0.5
          %v857 = vmul.f32 %v853, 0.5
          %v858 = vmul.f32 %v840, %v840
          %v859 = vmul.f32 %v853, %v853
          %v860 = vmul.f32 %v858, %v840
          %v861 = vmul.f32 %v859, %v853
          %v862 = vmul.f32 %v860, 0.044715
          %v863 = vmul.f32 %v861, 0.044715
          %v864 = vadd.f32 %v840, %v862
          %v865 = vadd.f32 %v853, %v863
          %v866 = vmul.f32 %v864, 0.7978846
          %v867 = vmul.f32 %v865, 0.7978846
          %v868 = vtanh.pop %v866
          %v869 = vtanh.pop %v867
          %v870 = vadd.f32 %v868, 1.0
          %v871 = vadd.f32 %v869, 1.0
          %v872 = vmul.f32 %v856, %v870
          %v873 = vmul.f32 %v857, %v871
          %v874 = vpack.c.bf16 %v872, %v872
          %v875 = vpack.c.bf16 %v873, %v873
          %v876 = vld [vmem:[%s5] sm:$0xf]
          %v877 = vld [vmem:[%s5 + $0x4] sm:$0xf]
          %v878 = vld [vmem:[%s5 + $0x8] sm:$0xf]
          %v879 = vld [vmem:[%s5 + $0xc] sm:$0xf]
          %v880 = vld [vmem:[%s5 + $0x10] sm:$0xf]
          %v881 = vld [vmem:[%s5 + $0x14] sm:$0xf]
          %v882 = vld [vmem:[%s5 + $0x18] sm:$0xf]
          %v883 = vld [vmem:[%s5 + $0x1c] sm:$0xf]
          %v884 = vld [vmem:[%s5 + $0x20] sm:$0xf]
          %v885 = vld [vmem:[%s5 + $0x24] sm:$0xf]
          %v886 = vld [vmem:[%s5 + $0x28] sm:$0xf]
          %v887 = vld [vmem:[%s5 + $0x2c] sm:$0xf]
          %v888 = vld [vmem:[%s5 + $0x30] sm:$0xf]
          %v889 = vld [vmem:[%s5 + $0x34] sm:$0xf]
          %v890 = vld [vmem:[%s5 + $0x38] sm:$0xf]
          %v891 = vld [vmem:[%s5 + $0x3c] sm:$0xf]
          %v892 = vld [vmem:[%s5 + $0x40] sm:$0xf]
          %v893 = vld [vmem:[%s5 + $0x44] sm:$0xf]
          %v894 = vld [vmem:[%s5 + $0x48] sm:$0xf]
          %v895 = vld [vmem:[%s5 + $0x4c] sm:$0xf]
          %v896 = vld [vmem:[%s5 + $0x50] sm:$0xf]
          %v897 = vld [vmem:[%s5 + $0x54] sm:$0xf]
          %v898 = vld [vmem:[%s5 + $0x58] sm:$0xf]
          %v899 = vld [vmem:[%s5 + $0x5c] sm:$0xf]
          %v900 = vld [vmem:[%s5 + $0x60] sm:$0xf]
          %v901 = vld [vmem:[%s5 + $0x64] sm:$0xf]
          %v902 = vld [vmem:[%s5 + $0x68] sm:$0xf]
          %v903 = vld [vmem:[%s5 + $0x6c] sm:$0xf]
          %v904 = vld [vmem:[%s5 + $0x70] sm:$0xf]
          %v905 = vld [vmem:[%s5 + $0x74] sm:$0xf]
          %v906 = vld [vmem:[%s5 + $0x78] sm:$0xf]
          %v907 = vld [vmem:[%s5 + $0x7c] sm:$0xf]
          %v940 = vunpack.c.l.b16 %v876
          %v941 = vunpack.c.l.b16 %v877
          %v942 = vunpack.c.l.b16 %v878
          %v943 = vunpack.c.l.b16 %v879
          %v944 = vunpack.c.l.b16 %v880
          %v945 = vunpack.c.l.b16 %v881
          %v946 = vunpack.c.l.b16 %v882
          %v947 = vunpack.c.l.b16 %v883
          %v948 = vunpack.c.l.b16 %v884
          %v949 = vunpack.c.l.b16 %v885
          %v950 = vunpack.c.l.b16 %v886
          %v951 = vunpack.c.l.b16 %v887
          %v952 = vunpack.c.l.b16 %v888
          %v953 = vunpack.c.l.b16 %v889
          %v954 = vunpack.c.l.b16 %v890
          %v955 = vunpack.c.l.b16 %v891
          %v956 = vunpack.c.l.b16 %v892
          %v957 = vunpack.c.l.b16 %v893
          %v958 = vunpack.c.l.b16 %v894
          %v959 = vunpack.c.l.b16 %v895
          %v960 = vunpack.c.l.b16 %v896
          %v961 = vunpack.c.l.b16 %v897
          %v962 = vunpack.c.l.b16 %v898
          %v963 = vunpack.c.l.b16 %v899
          %v964 = vunpack.c.l.b16 %v900
          %v965 = vunpack.c.l.b16 %v901
          %v966 = vunpack.c.l.b16 %v902
          %v967 = vunpack.c.l.b16 %v903
          %v968 = vunpack.c.l.b16 %v904
          %v969 = vunpack.c.l.b16 %v905
          %v970 = vunpack.c.l.b16 %v906
          %v971 = vunpack.c.l.b16 %v907
          %v972 = vpack.c.b16 %v941, %v940
          %v973 = vpack.c.b16 %v943, %v942
          %v974 = vpack.c.b16 %v945, %v944
          %v975 = vpack.c.b16 %v947, %v946
          %v976 = vpack.c.b16 %v949, %v948
          %v977 = vpack.c.b16 %v951, %v950
          %v978 = vpack.c.b16 %v953, %v952
          %v979 = vpack.c.b16 %v955, %v954
          %v980 = vpack.c.b16 %v957, %v956
          %v981 = vpack.c.b16 %v959, %v958
          %v982 = vpack.c.b16 %v961, %v960
          %v983 = vpack.c.b16 %v963, %v962
          %v984 = vpack.c.b16 %v965, %v964
          %v985 = vpack.c.b16 %v967, %v966
          %v986 = vpack.c.b16 %v969, %v968
          %v987 = vpack.c.b16 %v971, %v970
          %1004 = vmatpush.bf16.msra.mxu0 %v979
          %1005 = vmatpush.bf16.msra.mxu0 %v978
          %1006 = vmatpush.bf16.msra.mxu0 %v977
          %1007 = vmatpush.bf16.msra.mxu0 %v976
          %1008 = vmatpush.bf16.msra.mxu0 %v975
          %1009 = vmatpush.bf16.msra.mxu0 %v974
          %1010 = vmatpush.bf16.msra.mxu0 %v973
          %1011 = vmatpush.bf16.msra.mxu0 %v972
          %1012 = vmatmul.bf16.gmra.mxu0 %v874
          %v1013 = vpop.f32.mrf.mxu0
          %v1014 = vadd.f32 %v601, %v1013
          %v1015 = vpop.f32.mrf.mxu0
          %1016 = vdwg.mxu0
          %1017 = vmatpush.bf16.msra.mxu0 %v987
          %1018 = vmatpush.bf16.msra.mxu0 %v986
          %1019 = vmatpush.bf16.msra.mxu0 %v985
          %1020 = vmatpush.bf16.msra.mxu0 %v984
          %1021 = vmatpush.bf16.msra.mxu0 %v983
          %1022 = vmatpush.bf16.msra.mxu0 %v982
          %1023 = vmatpush.bf16.msra.mxu0 %v981
          %1024 = vmatpush.bf16.msra.mxu0 %v980
          %1025 = vmatmul.bf16.gmra.mxu0 %v875
          %v1026 = vpop.f32.mrf.mxu0
          %v1027 = vadd.f32 %v1014, %v1026
          %v1028 = vpop.f32.mrf.mxu0
          %1029 = vdwg.mxu0
          %v1030 = vld [vmem:[%s7] sm:$0xf]
          %v1031 = vld [vmem:[%s7 + $0x4] sm:$0xf]
          %v1032 = vld [vmem:[%s7 + $0x8] sm:$0xf]
          %v1033 = vld [vmem:[%s7 + $0xc] sm:$0xf]
          %v1034 = vld [vmem:[%s7 + $0x10] sm:$0xf]
          %v1035 = vld [vmem:[%s7 + $0x14] sm:$0xf]
          %v1036 = vld [vmem:[%s7 + $0x18] sm:$0xf]
          %v1037 = vld [vmem:[%s7 + $0x1c] sm:$0xf]
          %v1038 = vld [vmem:[%s7 + $0x20] sm:$0xf]
          %v1039 = vld [vmem:[%s7 + $0x24] sm:$0xf]
          %v1040 = vld [vmem:[%s7 + $0x28] sm:$0xf]
          %v1041 = vld [vmem:[%s7 + $0x2c] sm:$0xf]
          %v1042 = vld [vmem:[%s7 + $0x30] sm:$0xf]
          %v1043 = vld [vmem:[%s7 + $0x34] sm:$0xf]
          %v1044 = vld [vmem:[%s7 + $0x38] sm:$0xf]
          %v1045 = vld [vmem:[%s7 + $0x3c] sm:$0xf]
          %v1046 = vpack.c.bf16 %v1027, %v1027
          %v1047 = vld [vmem:[%s8] sm:$0xf]
          %v1048 = vld [vmem:[%s8 + $0x4] sm:$0xf]
          %v1049 = vld [vmem:[%s8 + $0x8] sm:$0xf]
          %v1050 = vld [vmem:[%s8 + $0xc] sm:$0xf]
          %v1051 = vld [vmem:[%s8 + $0x10] sm:$0xf]
          %v1052 = vld [vmem:[%s8 + $0x14] sm:$0xf]
          %v1053 = vld [vmem:[%s8 + $0x18] sm:$0xf]
          %v1054 = vld [vmem:[%s8 + $0x1c] sm:$0xf]
          %v1055 = vld [vmem:[%s8 + $0x20] sm:$0xf]
          %v1056 = vld [vmem:[%s8 + $0x24] sm:$0xf]
          %v1057 = vld [vmem:[%s8 + $0x28] sm:$0xf]
          %v1058 = vld [vmem:[%s8 + $0x2c] sm:$0xf]
          %v1059 = vld [vmem:[%s8 + $0x30] sm:$0xf]
          %v1060 = vld [vmem:[%s8 + $0x34] sm:$0xf]
          %v1061 = vld [vmem:[%s8 + $0x38] sm:$0xf]
          %v1062 = vld [vmem:[%s8 + $0x3c] sm:$0xf]
          %v1079 = vunpack.c.l.b16 %v1047
          %v1080 = vunpack.c.l.b16 %v1048
          %v1081 = vunpack.c.l.b16 %v1049
          %v1082 = vunpack.c.l.b16 %v1050
          %v1083 = vunpack.c.l.b16 %v1051
          %v1084 = vunpack.c.l.b16 %v1052
          %v1085 = vunpack.c.l.b16 %v1053
          %v1086 = vunpack.c.l.b16 %v1054
          %v1087 = vunpack.c.l.b16 %v1055
          %v1088 = vunpack.c.l.b16 %v1056
          %v1089 = vunpack.c.l.b16 %v1057
          %v1090 = vunpack.c.l.b16 %v1058
          %v1091 = vunpack.c.l.b16 %v1059
          %v1092 = vunpack.c.l.b16 %v1060
          %v1093 = vunpack.c.l.b16 %v1061
          %v1094 = vunpack.c.l.b16 %v1062
          %v1095 = vpack.c.b16 %v1080, %v1079
          %v1096 = vpack.c.b16 %v1082, %v1081
          %v1097 = vpack.c.b16 %v1084, %v1083
          %v1098 = vpack.c.b16 %v1086, %v1085
          %v1099 = vpack.c.b16 %v1088, %v1087
          %v1100 = vpack.c.b16 %v1090, %v1089
          %v1101 = vpack.c.b16 %v1092, %v1091
          %v1102 = vpack.c.b16 %v1094, %v1093
          %1111 = vmatpush.bf16.msra.mxu0 %v1102
          %1112 = vmatpush.bf16.msra.mxu0 %v1101
          %1113 = vmatpush.bf16.msra.mxu0 %v1100
          %1114 = vmatpush.bf16.msra.mxu0 %v1099
          %1115 = vmatpush.bf16.msra.mxu0 %v1098
          %1116 = vmatpush.bf16.msra.mxu0 %v1097
          %1117 = vmatpush.bf16.msra.mxu0 %v1096
          %1118 = vmatpush.bf16.msra.mxu0 %v1095
          %1119 = vmatmul.bf16.gmra.mxu0 %v1046
          %v1120 = vpop.f32.mrf.mxu0
          %v1121 = vadd.f32 0.0, %v1120
          %v1122 = vpop.f32.mrf.mxu0
          %1123 = vdwg.mxu0
          %v1140 = vunpack.c.l.b16 %v1030
          %v1141 = vunpack.c.l.b16 %v1031
          %v1142 = vunpack.c.l.b16 %v1032
          %v1143 = vunpack.c.l.b16 %v1033
          %v1144 = vunpack.c.l.b16 %v1034
          %v1145 = vunpack.c.l.b16 %v1035
          %v1146 = vunpack.c.l.b16 %v1036
          %v1147 = vunpack.c.l.b16 %v1037
          %v1148 = vunpack.c.l.b16 %v1038
          %v1149 = vunpack.c.l.b16 %v1039
          %v1150 = vunpack.c.l.b16 %v1040
          %v1151 = vunpack.c.l.b16 %v1041
          %v1152 = vunpack.c.l.b16 %v1042
          %v1153 = vunpack.c.l.b16 %v1043
          %v1154 = vunpack.c.l.b16 %v1044
          %v1155 = vunpack.c.l.b16 %v1045
          %v1156 = vpack.c.b16 %v1141, %v1140
          %v1157 = vpack.c.b16 %v1143, %v1142
          %v1158 = vpack.c.b16 %v1145, %v1144
          %v1159 = vpack.c.b16 %v1147, %v1146
          %v1160 = vpack.c.b16 %v1149, %v1148
          %v1161 = vpack.c.b16 %v1151, %v1150
          %v1162 = vpack.c.b16 %v1153, %v1152
          %v1163 = vpack.c.b16 %v1155, %v1154
          %1172 = vmatpush.bf16.msra.mxu0 %v1163
          %1173 = vmatpush.bf16.msra.mxu0 %v1162
          %1174 = vmatpush.bf16.msra.mxu0 %v1161
          %1175 = vmatpush.bf16.msra.mxu0 %v1160
          %1176 = vmatpush.bf16.msra.mxu0 %v1159
          %1177 = vmatpush.bf16.msra.mxu0 %v1158
          %1178 = vmatpush.bf16.msra.mxu0 %v1157
          %1179 = vmatpush.bf16.msra.mxu0 %v1156
          %1180 = vmatmul.bf16.gmra.mxu0 %v733
          %v1181 = vpop.f32.mrf.mxu0
          %v1182 = vadd.f32 %v1121, %v1181
          %v1183 = vpop.f32.mrf.mxu0
          %1184 = vdwg.mxu0
          %v1186 = vperm.slane %v418, 0
          %v1188 = vadd.f32 %v1182, %v1186
          %v1189 = vmul.f32 %v1188, 0.5
          %v1190 = vmul.f32 %v1188, %v1188
          %v1191 = vmul.f32 %v1190, %v1188
          %v1192 = vmul.f32 %v1191, 0.044715
          %v1193 = vadd.f32 %v1188, %v1192
          %v1194 = vmul.f32 %v1193, 0.7978846
          %v1195 = vtanh.pop %v1194
          %v1196 = vadd.f32 %v1195, 1.0
          %v1197 = vmul.f32 %v1189, %v1196
          %v1198 = vpack.c.bf16 %v1197, %v1197
          %v1199 = vld [vmem:[%s10] sm:$0xf]
          %v1200 = vld [vmem:[%s10 + $0x4] sm:$0xf]
          %v1201 = vld [vmem:[%s10 + $0x8] sm:$0xf]
          %v1202 = vld [vmem:[%s10 + $0xc] sm:$0xf]
          %v1203 = vld [vmem:[%s10 + $0x10] sm:$0xf]
          %v1204 = vld [vmem:[%s10 + $0x14] sm:$0xf]
          %v1205 = vld [vmem:[%s10 + $0x18] sm:$0xf]
          %v1206 = vld [vmem:[%s10 + $0x1c] sm:$0xf]
          %v1207 = vld [vmem:[%s10 + $0x20] sm:$0xf]
          %v1208 = vld [vmem:[%s10 + $0x24] sm:$0xf]
          %v1209 = vld [vmem:[%s10 + $0x28] sm:$0xf]
          %v1210 = vld [vmem:[%s10 + $0x2c] sm:$0xf]
          %v1211 = vld [vmem:[%s10 + $0x30] sm:$0xf]
          %v1212 = vld [vmem:[%s10 + $0x34] sm:$0xf]
          %v1213 = vld [vmem:[%s10 + $0x38] sm:$0xf]
          %v1214 = vld [vmem:[%s10 + $0x3c] sm:$0xf]
          %v1216 = vperm.slane %v419, 0
          %v1234 = vunpack.c.l.b16 %v1199
          %v1235 = vunpack.c.l.b16 %v1200
          %v1236 = vunpack.c.l.b16 %v1201
          %v1237 = vunpack.c.l.b16 %v1202
          %v1238 = vunpack.c.l.b16 %v1203
          %v1239 = vunpack.c.l.b16 %v1204
          %v1240 = vunpack.c.l.b16 %v1205
          %v1241 = vunpack.c.l.b16 %v1206
          %v1242 = vunpack.c.l.b16 %v1207
          %v1243 = vunpack.c.l.b16 %v1208
          %v1244 = vunpack.c.l.b16 %v1209
          %v1245 = vunpack.c.l.b16 %v1210
          %v1246 = vunpack.c.l.b16 %v1211
          %v1247 = vunpack.c.l.b16 %v1212
          %v1248 = vunpack.c.l.b16 %v1213
          %v1249 = vunpack.c.l.b16 %v1214
          %v1250 = vpack.c.b16 %v1235, %v1234
          %v1251 = vpack.c.b16 %v1237, %v1236
          %v1252 = vpack.c.b16 %v1239, %v1238
          %v1253 = vpack.c.b16 %v1241, %v1240
          %v1254 = vpack.c.b16 %v1243, %v1242
          %v1255 = vpack.c.b16 %v1245, %v1244
          %v1256 = vpack.c.b16 %v1247, %v1246
          %v1257 = vpack.c.b16 %v1249, %v1248
          %1266 = vmatpush.bf16.msra.mxu0 %v1257
          %1267 = vmatpush.bf16.msra.mxu0 %v1256
          %1268 = vmatpush.bf16.msra.mxu0 %v1255
          %1269 = vmatpush.bf16.msra.mxu0 %v1254
          %1270 = vmatpush.bf16.msra.mxu0 %v1253
          %1271 = vmatpush.bf16.msra.mxu0 %v1252
          %1272 = vmatpush.bf16.msra.mxu0 %v1251
          %1273 = vmatpush.bf16.msra.mxu0 %v1250
          %1274 = vmatmul.bf16.gmra.mxu0 %v1198
          %v1275 = vpop.f32.mrf.mxu0
          %v1276 = vadd.f32 %v1216, %v1275
          %v1277 = vpop.f32.mrf.mxu0
          %1278 = vdwg.mxu0
          %s1279 = sadd.s32 %s727, 1
          %v1280 = vstv %s1279
          %vm1281 = vcmp.gt.s32.totalorder %v415, %v1280
          %v1282 = vsel %vm1281, 1, 0
          %1283 = vset.pattern.permute.xlu0 0
          %1284 = vperm.xlu0 %1283, %v1282
          %v1285 = vpop.permute.xlu0 %1284
          %vm1286 = vcmp.eq.s32.totalorder %v1285, 1
          %v1287 = vsel %vm1286, %v1276, %v732
        $region73: #{adaptive_recursive_reasoner.1} parent=67 // loop_footer
          %s729 = sadd.s32 %s727, 1
        $region74: #{adaptive_recursive_reasoner.1} parent=67 // loop_footer_branch
          %726 = sbr.rel target = $region70
        $region75: #{adaptive_recursive_reasoner.1} parent=67 // loop_exit
          _
        %vm1288 = vcmp.gt.s32.totalorder %v415, 0
        %v1289 = vadd.f32 %v409, %v732
        %v1290 = vsel %vm1288, 1, 0
        %1291 = vset.pattern.permute.xlu0 0
        %1292 = vperm.xlu0 %1291, %v1290
        %v1293 = vpop.permute.xlu0 %1292
        %vm1294 = vcmp.eq.s32.totalorder %v1293, 1
        %v1295 = vsel %vm1294, %v1289, %v409
        %1296 = vst [vmem:[%s407] sm:$0xff] %v1295
      $region68: #{adaptive_recursive_reasoner.1} parent=63 // pred_fallthru
        _
      %p1297 = scmp.lt.s32.totalorder %s31, 1
      %s1298 = scalar_select %p1297, %s31, 1
      %s1299 = smul.addr %s1298, 8
      %s1300 = scalar_lea.vmem %s12, %s1299
      // Predicated region
      $region76: #{adaptive_recursive_reasoner.1} parent=63 // pred_check
        %p1301 = pneg %p290
      $region77: #{adaptive_recursive_reasoner.1} parent=63 // pred_check_branch
        %1303 = sbr.rel (%p1301) target = $region79
      $region78: #{adaptive_recursive_reasoner.1} parent=63 // pred_region
        _
      $region79: #{adaptive_recursive_reasoner.1} parent=63 // pred_fallthru
        _
    $region64: #{adaptive_recursive_reasoner.1} parent=5 // pred_fallthru
      _
    %p1304 = scmp.le.s32.totalorder 2, %s26
    // Predicated region
    $region80: #{adaptive_recursive_reasoner.1} parent=5 // pred_check
      %p1305 = pneg %p1304
    $region81: #{adaptive_recursive_reasoner.1} parent=5 // pred_check_branch
      %1307 = sbr.rel (%p1305) target = $region83
    $region82: #{adaptive_recursive_reasoner.1} parent=5 // pred_region
      %s1308 = ssub.s32 %s26, 2
      // Predicated region
      $region84: #{adaptive_recursive_reasoner.1} parent=82 // pred_check
        %p1309 = pneg %p296
      $region85: #{adaptive_recursive_reasoner.1} parent=82 // pred_check_branch
        %1311 = sbr.rel (%p1309) target = $region87
      $region86: #{adaptive_recursive_reasoner.1} parent=82 // pred_region
        %p1312 = scmp.lt.s32.totalorder %s32, 1
        %s1313 = scalar_select %p1312, %s32, 1
        %s1314 = smul.addr %s1313, 8
        %s1315 = scalar_lea.vmem %s12, %s1314
      $region87: #{adaptive_recursive_reasoner.1} parent=82 // pred_fallthru
        _
    $region83: #{adaptive_recursive_reasoner.1} parent=5 // pred_fallthru
      _
  $region6: #{adaptive_recursive_reasoner.1} parent=0 // loop_footer
    %s30 = sadd.s32 1, %s26
  $region7: #{adaptive_recursive_reasoner.1} parent=0 // loop_footer_branch
    %25 = sbr.rel target = $region3
  $region8: #{adaptive_recursive_reasoner.1} parent=0 // loop_exit
    _

</llo_original>
